<compile_context>
chip_gen: v5e
topology: v5e:2x2
jax: 0.10.0
libtpu: 0.0.40
codegen_flags: <defaults>
</compile_context>

<pallas_src>
import numpy as np
import jax
import jax.numpy as jnp
from jax.experimental import pallas as pl
from jax.experimental.pallas import tpu as pltpu


def _round_up(x, m):
    return (x + m - 1) // m * m


# ----------------------------- Pallas kernel --------------------------------

def _make_stem_kernel(Ho, Wo, Hq, Wq, Wp, Hp, C1g, C2p, row_chunk, pool_chunk):
    n_groups = 16  # 4x4 groups of kernel taps (2x2 stride phases live in channels)
    NEG = float("-inf")

    def kernel(pg_ref, w_ref, shift_ref, o_ref, yw_ref, cm_ref):
        # pg_ref:   (1, R, C, C1g)    phase-grouped padded input (channels = 2x2 phases * C1)
        # w_ref:    (16*C1g, C2p)     grouped conv weights, BN scale folded, zero phantom taps
        # shift_ref:(1, C2p)          folded BN shift
        # o_ref:    (1, Hq, Wq, C2p)  pooled output
        # yw_ref:   (row_chunk, Wp, C2p)  conv chunk staging, -inf pool-pad columns
        # cm_ref:   (Hp, Wq, C2p)     column-pooled rows, -inf pool-pad rows
        shift = shift_ref[...]                                      # (1, C2p)

        # -inf boundary cols/rows for the separable pool; the conv loop never writes them.
        yw_ref[:, 0:1, :] = jnp.full((row_chunk, 1, C2p), NEG, jnp.float32)
        if Wo + 1 < Wp:
            yw_ref[:, Wo + 1:Wp, :] = jnp.full((row_chunk, Wp - Wo - 1, C2p), NEG, jnp.float32)
        cm_ref[0:1, :, :] = jnp.full((1, Wq, C2p), NEG, jnp.float32)
        if Ho + 1 < Hp:
            cm_ref[Ho + 1:Hp, :, :] = jnp.full((Hp - Ho - 1, Wq, C2p), NEG, jnp.float32)

        # ---- Conv 7x7 / s2 (+ folded BN + SiLU) with fused W-direction pool, chunked ----
        for h0 in range(0, Ho, row_chunk):
            hc = min(row_chunk, Ho - h0)
            m = hc * Wo
            acc = jnp.zeros((m, C2p), jnp.float32)
            for g in range(n_groups):
                r0, c0 = g // 4, g % 4
                sl = pg_ref[0, h0 + r0:h0 + r0 + hc, c0:c0 + Wo, :]  # (hc, Wo, C1g)
                acc = acc + jnp.dot(sl.reshape(m, C1g),
                                    w_ref[g * C1g:(g + 1) * C1g, :],
                                    preferred_element_type=jnp.float32)
            y = acc + shift                                          # BN shift (scale in w)
            y = y * jax.nn.sigmoid(y)                                # SiLU
            yw_ref[0:hc, 1:1 + Wo, :] = y.reshape(hc, Wo, C2p)

            # 3-tap / stride-2 max along W: three strided reads over the whole chunk slab.
            e0 = yw_ref[0:hc, pl.ds(0, Wq, stride=2), :]             # cols 2b-1 (left pad)
            e1 = yw_ref[0:hc, pl.ds(1, Wq, stride=2), :]             # cols 2b
            e2 = yw_ref[0:hc, pl.ds(2, Wq, stride=2), :]             # cols 2b+1
            cm_ref[1 + h0:1 + h0 + hc, :, :] = jnp.maximum(jnp.maximum(e0, e1), e2)

        # ---- 3-tap / stride-2 max along H: leading-dim-only reshape, whole slabs -------
        for a0 in range(0, Hq, pool_chunk):
            hq = min(pool_chunk, Hq - a0)
            base = 2 * a0
            v01 = cm_ref[base:base + 2 * hq, :, :].reshape(hq, 2, Wq, C2p)
            v2 = cm_ref[base + 2:base + 2 * hq + 2, :, :].reshape(hq, 2, Wq, C2p)
            out = jnp.maximum(jnp.maximum(v01[:, 0], v01[:, 1]), v2[:, 0])
            o_ref[0, a0:a0 + hq, :, :] = out.astype(o_ref.dtype)

    return kernel


# ------------------------------- Wrapper -------------------------------------

def basic_stem_nhwc(x_nhwc, w_oihw, gamma, beta, mean, var, eps=1e-5):
    N, H, W, C1 = x_nhwc.shape
    C2 = w_oihw.shape[0]
    Ho = (H + 6 - 7) // 2 + 1
    Wo = (W + 6 - 7) // 2 + 1
    Hq = (Ho + 2 - 3) // 2 + 1
    Wq = (Wo + 2 - 3) // 2 + 1
    C1g = 4 * C1                       # 2x2 stride-phase grouped channels
    C2p = _round_up(C2, 128)           # lane-dense matmul-N / output channels
    Wp = 2 * Wq + 1                    # left -inf col + conv cols (+ right -inf col if Wo odd)
    Hp = 2 * Hq + 2                    # top -inf row + conv rows + bottom -inf row(s)

    # --- zero-pad (conv pad=3) and split into 2x2 stride phases (no im2col blow-up) ---
    eh = (H + 6) % 2
    ew = (W + 6) % 2
    xp = jnp.pad(x_nhwc, ((0, 0), (3, 3 + eh), (3, 3 + ew), (0, 0)))
    phases = [xp[:, rp::2, cp::2, :] for rp in (0, 1) for cp in (0, 1)]
    pg = jnp.concatenate(phases, axis=-1).astype(jnp.float32)      # (N, R, C, 4*C1)
    R, Cc = int(pg.shape[1]), int(pg.shape[2])

    # --- grouped weights with folded BN scale; zero rows for phantom 8th-row/col taps ---
    s = (gamma / jnp.sqrt(var + eps)).astype(jnp.float32)          # (C2,)
    shift = (beta - mean * s).astype(jnp.float32)                  # (C2,)
    w_hwio = jnp.transpose(w_oihw, (2, 3, 1, 0)).astype(jnp.float32) * s   # (7,7,C1,C2)
    w_pad = jnp.pad(w_hwio, ((0, 1), (0, 1), (0, 0), (0, 0)))      # (8,8,C1,C2), row/col 7 = 0
    wg = jnp.transpose(w_pad.reshape(4, 2, 4, 2, C1, C2), (0, 2, 1, 3, 4, 5))
    w_mat = jnp.pad(wg.reshape(16 * C1g, C2), ((0, 0), (0, C2p - C2)))     # (16*C1g, C2p)
    shift_p = jnp.pad(shift, (0, C2p - C2)).reshape(1, C2p)

    # bound live f32 accumulator / staging values (~2 MB each) for large images
    row_chunk = max(1, min(Ho, (1 << 19) // max(1, Wo * C2p)))
    pool_chunk = max(1, min(Hq, (1 << 19) // max(1, Wq * C2p)))
    kernel = _make_stem_kernel(Ho, Wo, Hq, Wq, Wp, Hp, C1g, C2p, row_chunk, pool_chunk)

    out = pl.pallas_call(
        kernel,
        out_shape=jax.ShapeDtypeStruct((N, Hq, Wq, C2p), x_nhwc.dtype),
        grid=(N,),
        in_specs=[
            pl.BlockSpec((1, R, Cc, C1g), lambda n: (n, 0, 0, 0)),
            pl.BlockSpec((16 * C1g, C2p), lambda n: (0, 0)),
            pl.BlockSpec((1, C2p), lambda n: (0, 0)),
        ],
        out_specs=pl.BlockSpec((1, Hq, Wq, C2p), lambda n: (n, 0, 0, 0)),
        scratch_shapes=[
            pltpu.VMEM((row_chunk, Wp, C2p), jnp.float32),   # conv chunk + W-pool staging
            pltpu.VMEM((Hp, Wq, C2p), jnp.float32),          # column-pooled intermediate
        ],
        compiler_params=pltpu.CompilerParams(
            dimension_semantics=("parallel",),
            vmem_limit_bytes=48 * 1024 * 1024,
        ),
        cost_estimate=pl.CostEstimate(
            flops=2 * N * Ho * Wo * 49 * C1 * C2,
            transcendentals=N * Ho * Wo * C2p,
            bytes_accessed=4 * (pg.size + w_mat.size + shift_p.size + N * Hq * Wq * C2p),
        ),
    )(pg, w_mat, shift_p)
    return out[..., :C2]                                           # drop padded lanes


@jax.jit
def basic_stem(x_nchw, w_oihw, gamma, beta, mean, var):
    # TODO(synk): BatchNorm is applied in eval mode with fixed running stats;
    # training-mode batch statistics are not reproduced.
    x_nhwc = jnp.transpose(x_nchw, (0, 2, 3, 1))
    y = basic_stem_nhwc(x_nhwc, w_oihw, gamma, beta, mean, var)
    return jnp.transpose(y, (0, 3, 1, 2))


# ------------------------------- Pure-JAX reference --------------------------

def reference_nchw(x_nchw, w_oihw, gamma, beta, mean, var, eps=1e-5):
    x = jnp.transpose(x_nchw, (0, 2, 3, 1))
    y = jax.lax.conv_general_dilated(
        x, jnp.transpose(w_oihw, (2, 3, 1, 0)),
        window_strides=(2, 2), padding=((3, 3), (3, 3)),
        dimension_numbers=("NHWC", "HWIO", "NHWC"))
    s = gamma / jnp.sqrt(var + eps)
    b = beta - mean * s
    y = y * s + b
    y = y * jax.nn.sigmoid(y)
    y = jnp.pad(y, ((0, 0), (1, 1), (1, 1), (0, 0)), constant_values=-jnp.inf)
    y = jax.lax.reduce_window(y, -jnp.inf, jax.lax.max,
                              (1, 3, 3, 1), (1, 2, 2, 1), "VALID")
    return jnp.transpose(y, (0, 3, 1, 2))


# ------------------------------------ main ------------------------------------

if __name__ == "__main__":
    key = jax.random.PRNGKey(0)
    kx, kw, kg, kb, km, kv = jax.random.split(key, 6)

    N, C1, H, W = 2, 4, 16, 16
    C2 = 8

    x = jax.random.normal(kx, (N, C1, H, W), jnp.float32)
    # Conv(c1, c2, k=7, s=2, p=3, bias=False) weight + BatchNorm2d(c2) params.
    w = jax.random.normal(kw, (C2, C1, 7, 7), jnp.float32) * 0.1
    gamma = jax.random.uniform(kg, (C2,), jnp.float32, 0.5, 1.5)
    beta = jax.random.normal(kb, (C2,), jnp.float32) * 0.1
    rmean = jax.random.normal(km, (C2,), jnp.float32) * 0.1
    rvar = jax.random.uniform(kv, (C2,), jnp.float32, 0.5, 1.5)

    out = basic_stem(x, w, gamma, beta, rmean, rvar)
    out = jax.block_until_ready(out)

    ref = jax.block_until_ready(reference_nchw(x, w, gamma, beta, rmean, rvar))
    assert out.shape == (N, C2, 4, 4), out.shape
    np.testing.assert_allclose(np.asarray(out), np.asarray(ref), rtol=1e-4, atol=1e-4)

    print("KERNEL_OK")
</pallas_src>

<mosaic_0001>
module attributes {stable_mosaic.version = 11 : i64} {
  func.func @kernel(%arg0: i32, %arg1: memref<1x11x11x16xf32, #tpu.memory_space<vmem>>, %arg2: memref<256x128xf32, #tpu.memory_space<vmem>>, %arg3: memref<1x128xf32, #tpu.memory_space<vmem>>, %arg4: memref<1x4x4x128xf32, #tpu.memory_space<vmem>>, %arg5: memref<8x9x128xf32, #tpu.memory_space<vmem>>, %arg6: memref<10x4x128xf32, #tpu.memory_space<vmem>>) attributes {dimension_semantics = [#tpu.dimension_semantics<parallel>], iteration_bounds = array<i64: 2>, scalar_prefetch = 0 : i64, scratch_operands = 2 : i64, tpu.core_type = #tpu.core_type<tc>, window_params = [{transform_indices = @transform_0, window_bounds = array<i64: 1, 11, 11, 16>}, {pipeline_mode = #tpu.pipeline_mode<synchronous>, transform_indices = @transform_1, window_bounds = array<i64: 256, 128>}, {pipeline_mode = #tpu.pipeline_mode<synchronous>, transform_indices = @transform_2, window_bounds = array<i64: 1, 128>}, {transform_indices = @transform_3, window_bounds = array<i64: 1, 4, 4, 128>}]} {
    %c0 = arith.constant 0 : index
    %c0_0 = arith.constant 0 : index
    %0 = vector.load %arg3[%c0, %c0_0] : memref<1x128xf32, #tpu.memory_space<vmem>>, vector<1x128xf32>
    %cst = arith.constant 0xFF800000 : f32
    %1 = vector.broadcast %cst : f32 to vector<8x1x128xf32>
    %c0_1 = arith.constant 0 : index
    %c0_2 = arith.constant 0 : index
    %c0_3 = arith.constant 0 : index
    %2 = vector.load %arg5[%c0_1, %c0_2, %c0_3] : memref<8x9x128xf32, #tpu.memory_space<vmem>>, vector<8x1x128xf32>
    tpu.vector_store %arg5[%c0_1, %c0_2, %c0_3], %1 {strides = array<i32>} : memref<8x9x128xf32, #tpu.memory_space<vmem>>, vector<8x1x128xf32>,
    %cst_4 = arith.constant 0xFF800000 : f32
    %3 = vector.broadcast %cst_4 : f32 to vector<1x4x128xf32>
    %c0_5 = arith.constant 0 : index
    %c0_6 = arith.constant 0 : index
    %c0_7 = arith.constant 0 : index
    %4 = vector.load %arg6[%c0_5, %c0_6, %c0_7] : memref<10x4x128xf32, #tpu.memory_space<vmem>>, vector<1x4x128xf32>
    tpu.vector_store %arg6[%c0_5, %c0_6, %c0_7], %3 {strides = array<i32>} : memref<10x4x128xf32, #tpu.memory_space<vmem>>, vector<1x4x128xf32>,
    %cst_8 = arith.constant 0xFF800000 : f32
    %5 = vector.broadcast %cst_8 : f32 to vector<1x4x128xf32>
    %c9 = arith.constant 9 : index
    %c0_9 = arith.constant 0 : index
    %c0_10 = arith.constant 0 : index
    %6 = vector.load %arg6[%c9, %c0_9, %c0_10] : memref<10x4x128xf32, #tpu.memory_space<vmem>>, vector<1x4x128xf32>
    tpu.vector_store %arg6[%c9, %c0_9, %c0_10], %5 {strides = array<i32>} : memref<10x4x128xf32, #tpu.memory_space<vmem>>, vector<1x4x128xf32>,
    %cst_11 = arith.constant 0.000000e+00 : f32
    %7 = vector.broadcast %cst_11 : f32 to vector<64x128xf32>
    %c0_12 = arith.constant 0 : index
    %c0_13 = arith.constant 0 : index
    %c0_14 = arith.constant 0 : index
    %c0_15 = arith.constant 0 : index
    %8 = vector.load %arg1[%c0_12, %c0_13, %c0_14, %c0_15] : memref<1x11x11x16xf32, #tpu.memory_space<vmem>>, vector<1x8x8x16xf32>
    %9 = vector.shape_cast %8 : vector<1x8x8x16xf32> to vector<8x8x16xf32>
    %10 = vector.shape_cast %9 : vector<8x8x16xf32> to vector<64x16xf32>
    %c0_16 = arith.constant 0 : index
    %c0_17 = arith.constant 0 : index
    %11 = vector.load %arg2[%c0_16, %c0_17] : memref<256x128xf32, #tpu.memory_space<vmem>>, vector<16x128xf32>
    %cst_18 = arith.constant dense<0.000000e+00> : vector<64x128xf32>
    %12 = tpu.matmul %10, %11, %cst_18 {dimension_numbers = #tpu.dot_dimension_numbers<[1], [0], [0], [1], [0, 0, 1, 1], [], []>} : vector<64x16xf32>, vector<16x128xf32>, vector<64x128xf32> -> vector<64x128xf32>
    %13 = arith.addf %7, %12 : vector<64x128xf32>
    %c0_19 = arith.constant 0 : index
    %c0_20 = arith.constant 0 : index
    %c1 = arith.constant 1 : index
    %c0_21 = arith.constant 0 : index
    %14 = vector.load %arg1[%c0_19, %c0_20, %c1, %c0_21] : memref<1x11x11x16xf32, #tpu.memory_space<vmem>>, vector<1x8x8x16xf32>
    %15 = vector.shape_cast %14 : vector<1x8x8x16xf32> to vector<8x8x16xf32>
    %16 = vector.shape_cast %15 : vector<8x8x16xf32> to vector<64x16xf32>
    %c16 = arith.constant 16 : index
    %c0_22 = arith.constant 0 : index
    %17 = vector.load %arg2[%c16, %c0_22] : memref<256x128xf32, #tpu.memory_space<vmem>>, vector<16x128xf32>
    %cst_23 = arith.constant dense<0.000000e+00> : vector<64x128xf32>
    %18 = tpu.matmul %16, %17, %cst_23 {dimension_numbers = #tpu.dot_dimension_numbers<[1], [0], [0], [1], [0, 0, 1, 1], [], []>} : vector<64x16xf32>, vector<16x128xf32>, vector<64x128xf32> -> vector<64x128xf32>
    %19 = arith.addf %13, %18 : vector<64x128xf32>
    %c0_24 = arith.constant 0 : index
    %c0_25 = arith.constant 0 : index
    %c2 = arith.constant 2 : index
    %c0_26 = arith.constant 0 : index
    %20 = vector.load %arg1[%c0_24, %c0_25, %c2, %c0_26] : memref<1x11x11x16xf32, #tpu.memory_space<vmem>>, vector<1x8x8x16xf32>
    %21 = vector.shape_cast %20 : vector<1x8x8x16xf32> to vector<8x8x16xf32>
    %22 = vector.shape_cast %21 : vector<8x8x16xf32> to vector<64x16xf32>
    %c32 = arith.constant 32 : index
    %c0_27 = arith.constant 0 : index
    %23 = vector.load %arg2[%c32, %c0_27] : memref<256x128xf32, #tpu.memory_space<vmem>>, vector<16x128xf32>
    %cst_28 = arith.constant dense<0.000000e+00> : vector<64x128xf32>
    %24 = tpu.matmul %22, %23, %cst_28 {dimension_numbers = #tpu.dot_dimension_numbers<[1], [0], [0], [1], [0, 0, 1, 1], [], []>} : vector<64x16xf32>, vector<16x128xf32>, vector<64x128xf32> -> vector<64x128xf32>
    %25 = arith.addf %19, %24 : vector<64x128xf32>
    %c0_29 = arith.constant 0 : index
    %c0_30 = arith.constant 0 : index
    %c3 = arith.constant 3 : index
    %c0_31 = arith.constant 0 : index
    %26 = vector.load %arg1[%c0_29, %c0_30, %c3, %c0_31] : memref<1x11x11x16xf32, #tpu.memory_space<vmem>>, vector<1x8x8x16xf32>
    %27 = vector.shape_cast %26 : vector<1x8x8x16xf32> to vector<8x8x16xf32>
    %28 = vector.shape_cast %27 : vector<8x8x16xf32> to vector<64x16xf32>
    %c48 = arith.constant 48 : index
    %c0_32 = arith.constant 0 : index
    %29 = vector.load %arg2[%c48, %c0_32] : memref<256x128xf32, #tpu.memory_space<vmem>>, vector<16x128xf32>
    %cst_33 = arith.constant dense<0.000000e+00> : vector<64x128xf32>
    %30 = tpu.matmul %28, %29, %cst_33 {dimension_numbers = #tpu.dot_dimension_numbers<[1], [0], [0], [1], [0, 0, 1, 1], [], []>} : vector<64x16xf32>, vector<16x128xf32>, vector<64x128xf32> -> vector<64x128xf32>
    %31 = arith.addf %25, %30 : vector<64x128xf32>
    %c0_34 = arith.constant 0 : index
    %c1_35 = arith.constant 1 : index
    %c0_36 = arith.constant 0 : index
    %c0_37 = arith.constant 0 : index
    %32 = vector.load %arg1[%c0_34, %c1_35, %c0_36, %c0_37] : memref<1x11x11x16xf32, #tpu.memory_space<vmem>>, vector<1x8x8x16xf32>
    %33 = vector.shape_cast %32 : vector<1x8x8x16xf32> to vector<8x8x16xf32>
    %34 = vector.shape_cast %33 : vector<8x8x16xf32> to vector<64x16xf32>
    %c64 = arith.constant 64 : index
    %c0_38 = arith.constant 0 : index
    %35 = vector.load %arg2[%c64, %c0_38] : memref<256x128xf32, #tpu.memory_space<vmem>>, vector<16x128xf32>
    %cst_39 = arith.constant dense<0.000000e+00> : vector<64x128xf32>
    %36 = tpu.matmul %34, %35, %cst_39 {dimension_numbers = #tpu.dot_dimension_numbers<[1], [0], [0], [1], [0, 0, 1, 1], [], []>} : vector<64x16xf32>, vector<16x128xf32>, vector<64x128xf32> -> vector<64x128xf32>
    %37 = arith.addf %31, %36 : vector<64x128xf32>
    %c0_40 = arith.constant 0 : index
    %c1_41 = arith.constant 1 : index
    %c1_42 = arith.constant 1 : index
    %c0_43 = arith.constant 0 : index
    %38 = vector.load %arg1[%c0_40, %c1_41, %c1_42, %c0_43] : memref<1x11x11x16xf32, #tpu.memory_space<vmem>>, vector<1x8x8x16xf32>
    %39 = vector.shape_cast %38 : vector<1x8x8x16xf32> to vector<8x8x16xf32>
    %40 = vector.shape_cast %39 : vector<8x8x16xf32> to vector<64x16xf32>
    %c80 = arith.constant 80 : index
    %c0_44 = arith.constant 0 : index
    %41 = vector.load %arg2[%c80, %c0_44] : memref<256x128xf32, #tpu.memory_space<vmem>>, vector<16x128xf32>
    %cst_45 = arith.constant dense<0.000000e+00> : vector<64x128xf32>
    %42 = tpu.matmul %40, %41, %cst_45 {dimension_numbers = #tpu.dot_dimension_numbers<[1], [0], [0], [1], [0, 0, 1, 1], [], []>} : vector<64x16xf32>, vector<16x128xf32>, vector<64x128xf32> -> vector<64x128xf32>
    %43 = arith.addf %37, %42 : vector<64x128xf32>
    %c0_46 = arith.constant 0 : index
    %c1_47 = arith.constant 1 : index
    %c2_48 = arith.constant 2 : index
    %c0_49 = arith.constant 0 : index
    %44 = vector.load %arg1[%c0_46, %c1_47, %c2_48, %c0_49] : memref<1x11x11x16xf32, #tpu.memory_space<vmem>>, vector<1x8x8x16xf32>
    %45 = vector.shape_cast %44 : vector<1x8x8x16xf32> to vector<8x8x16xf32>
    %46 = vector.shape_cast %45 : vector<8x8x16xf32> to vector<64x16xf32>
    %c96 = arith.constant 96 : index
    %c0_50 = arith.constant 0 : index
    %47 = vector.load %arg2[%c96, %c0_50] : memref<256x128xf32, #tpu.memory_space<vmem>>, vector<16x128xf32>
    %cst_51 = arith.constant dense<0.000000e+00> : vector<64x128xf32>
    %48 = tpu.matmul %46, %47, %cst_51 {dimension_numbers = #tpu.dot_dimension_numbers<[1], [0], [0], [1], [0, 0, 1, 1], [], []>} : vector<64x16xf32>, vector<16x128xf32>, vector<64x128xf32> -> vector<64x128xf32>
    %49 = arith.addf %43, %48 : vector<64x128xf32>
    %c0_52 = arith.constant 0 : index
    %c1_53 = arith.constant 1 : index
    %c3_54 = arith.constant 3 : index
    %c0_55 = arith.constant 0 : index
    %50 = vector.load %arg1[%c0_52, %c1_53, %c3_54, %c0_55] : memref<1x11x11x16xf32, #tpu.memory_space<vmem>>, vector<1x8x8x16xf32>
    %51 = vector.shape_cast %50 : vector<1x8x8x16xf32> to vector<8x8x16xf32>
    %52 = vector.shape_cast %51 : vector<8x8x16xf32> to vector<64x16xf32>
    %c112 = arith.constant 112 : index
    %c0_56 = arith.constant 0 : index
    %53 = vector.load %arg2[%c112, %c0_56] : memref<256x128xf32, #tpu.memory_space<vmem>>, vector<16x128xf32>
    %cst_57 = arith.constant dense<0.000000e+00> : vector<64x128xf32>
    %54 = tpu.matmul %52, %53, %cst_57 {dimension_numbers = #tpu.dot_dimension_numbers<[1], [0], [0], [1], [0, 0, 1, 1], [], []>} : vector<64x16xf32>, vector<16x128xf32>, vector<64x128xf32> -> vector<64x128xf32>
    %55 = arith.addf %49, %54 : vector<64x128xf32>
    %c0_58 = arith.constant 0 : index
    %c2_59 = arith.constant 2 : index
    %c0_60 = arith.constant 0 : index
    %c0_61 = arith.constant 0 : index
    %56 = vector.load %arg1[%c0_58, %c2_59, %c0_60, %c0_61] : memref<1x11x11x16xf32, #tpu.memory_space<vmem>>, vector<1x8x8x16xf32>
    %57 = vector.shape_cast %56 : vector<1x8x8x16xf32> to vector<8x8x16xf32>
    %58 = vector.shape_cast %57 : vector<8x8x16xf32> to vector<64x16xf32>
    %c128 = arith.constant 128 : index
    %c0_62 = arith.constant 0 : index
    %59 = vector.load %arg2[%c128, %c0_62] : memref<256x128xf32, #tpu.memory_space<vmem>>, vector<16x128xf32>
    %cst_63 = arith.constant dense<0.000000e+00> : vector<64x128xf32>
    %60 = tpu.matmul %58, %59, %cst_63 {dimension_numbers = #tpu.dot_dimension_numbers<[1], [0], [0], [1], [0, 0, 1, 1], [], []>} : vector<64x16xf32>, vector<16x128xf32>, vector<64x128xf32> -> vector<64x128xf32>
    %61 = arith.addf %55, %60 : vector<64x128xf32>
    %c0_64 = arith.constant 0 : index
    %c2_65 = arith.constant 2 : index
    %c1_66 = arith.constant 1 : index
    %c0_67 = arith.constant 0 : index
    %62 = vector.load %arg1[%c0_64, %c2_65, %c1_66, %c0_67] : memref<1x11x11x16xf32, #tpu.memory_space<vmem>>, vector<1x8x8x16xf32>
    %63 = vector.shape_cast %62 : vector<1x8x8x16xf32> to vector<8x8x16xf32>
    %64 = vector.shape_cast %63 : vector<8x8x16xf32> to vector<64x16xf32>
    %c144 = arith.constant 144 : index
    %c0_68 = arith.constant 0 : index
    %65 = vector.load %arg2[%c144, %c0_68] : memref<256x128xf32, #tpu.memory_space<vmem>>, vector<16x128xf32>
    %cst_69 = arith.constant dense<0.000000e+00> : vector<64x128xf32>
    %66 = tpu.matmul %64, %65, %cst_69 {dimension_numbers = #tpu.dot_dimension_numbers<[1], [0], [0], [1], [0, 0, 1, 1], [], []>} : vector<64x16xf32>, vector<16x128xf32>, vector<64x128xf32> -> vector<64x128xf32>
    %67 = arith.addf %61, %66 : vector<64x128xf32>
    %c0_70 = arith.constant 0 : index
    %c2_71 = arith.constant 2 : index
    %c2_72 = arith.constant 2 : index
    %c0_73 = arith.constant 0 : index
    %68 = vector.load %arg1[%c0_70, %c2_71, %c2_72, %c0_73] : memref<1x11x11x16xf32, #tpu.memory_space<vmem>>, vector<1x8x8x16xf32>
    %69 = vector.shape_cast %68 : vector<1x8x8x16xf32> to vector<8x8x16xf32>
    %70 = vector.shape_cast %69 : vector<8x8x16xf32> to vector<64x16xf32>
    %c160 = arith.constant 160 : index
    %c0_74 = arith.constant 0 : index
    %71 = vector.load %arg2[%c160, %c0_74] : memref<256x128xf32, #tpu.memory_space<vmem>>, vector<16x128xf32>
    %cst_75 = arith.constant dense<0.000000e+00> : vector<64x128xf32>
    %72 = tpu.matmul %70, %71, %cst_75 {dimension_numbers = #tpu.dot_dimension_numbers<[1], [0], [0], [1], [0, 0, 1, 1], [], []>} : vector<64x16xf32>, vector<16x128xf32>, vector<64x128xf32> -> vector<64x128xf32>
    %73 = arith.addf %67, %72 : vector<64x128xf32>
    %c0_76 = arith.constant 0 : index
    %c2_77 = arith.constant 2 : index
    %c3_78 = arith.constant 3 : index
    %c0_79 = arith.constant 0 : index
    %74 = vector.load %arg1[%c0_76, %c2_77, %c3_78, %c0_79] : memref<1x11x11x16xf32, #tpu.memory_space<vmem>>, vector<1x8x8x16xf32>
    %75 = vector.shape_cast %74 : vector<1x8x8x16xf32> to vector<8x8x16xf32>
    %76 = vector.shape_cast %75 : vector<8x8x16xf32> to vector<64x16xf32>
    %c176 = arith.constant 176 : index
    %c0_80 = arith.constant 0 : index
    %77 = vector.load %arg2[%c176, %c0_80] : memref<256x128xf32, #tpu.memory_space<vmem>>, vector<16x128xf32>
    %cst_81 = arith.constant dense<0.000000e+00> : vector<64x128xf32>
    %78 = tpu.matmul %76, %77, %cst_81 {dimension_numbers = #tpu.dot_dimension_numbers<[1], [0], [0], [1], [0, 0, 1, 1], [], []>} : vector<64x16xf32>, vector<16x128xf32>, vector<64x128xf32> -> vector<64x128xf32>
    %79 = arith.addf %73, %78 : vector<64x128xf32>
    %c0_82 = arith.constant 0 : index
    %c3_83 = arith.constant 3 : index
    %c0_84 = arith.constant 0 : index
    %c0_85 = arith.constant 0 : index
    %80 = vector.load %arg1[%c0_82, %c3_83, %c0_84, %c0_85] : memref<1x11x11x16xf32, #tpu.memory_space<vmem>>, vector<1x8x8x16xf32>
    %81 = vector.shape_cast %80 : vector<1x8x8x16xf32> to vector<8x8x16xf32>
    %82 = vector.shape_cast %81 : vector<8x8x16xf32> to vector<64x16xf32>
    %c192 = arith.constant 192 : index
    %c0_86 = arith.constant 0 : index
    %83 = vector.load %arg2[%c192, %c0_86] : memref<256x128xf32, #tpu.memory_space<vmem>>, vector<16x128xf32>
    %cst_87 = arith.constant dense<0.000000e+00> : vector<64x128xf32>
    %84 = tpu.matmul %82, %83, %cst_87 {dimension_numbers = #tpu.dot_dimension_numbers<[1], [0], [0], [1], [0, 0, 1, 1], [], []>} : vector<64x16xf32>, vector<16x128xf32>, vector<64x128xf32> -> vector<64x128xf32>
    %85 = arith.addf %79, %84 : vector<64x128xf32>
    %c0_88 = arith.constant 0 : index
    %c3_89 = arith.constant 3 : index
    %c1_90 = arith.constant 1 : index
    %c0_91 = arith.constant 0 : index
    %86 = vector.load %arg1[%c0_88, %c3_89, %c1_90, %c0_91] : memref<1x11x11x16xf32, #tpu.memory_space<vmem>>, vector<1x8x8x16xf32>
    %87 = vector.shape_cast %86 : vector<1x8x8x16xf32> to vector<8x8x16xf32>
    %88 = vector.shape_cast %87 : vector<8x8x16xf32> to vector<64x16xf32>
    %c208 = arith.constant 208 : index
    %c0_92 = arith.constant 0 : index
    %89 = vector.load %arg2[%c208, %c0_92] : memref<256x128xf32, #tpu.memory_space<vmem>>, vector<16x128xf32>
    %cst_93 = arith.constant dense<0.000000e+00> : vector<64x128xf32>
    %90 = tpu.matmul %88, %89, %cst_93 {dimension_numbers = #tpu.dot_dimension_numbers<[1], [0], [0], [1], [0, 0, 1, 1], [], []>} : vector<64x16xf32>, vector<16x128xf32>, vector<64x128xf32> -> vector<64x128xf32>
    %91 = arith.addf %85, %90 : vector<64x128xf32>
    %c0_94 = arith.constant 0 : index
    %c3_95 = arith.constant 3 : index
    %c2_96 = arith.constant 2 : index
    %c0_97 = arith.constant 0 : index
    %92 = vector.load %arg1[%c0_94, %c3_95, %c2_96, %c0_97] : memref<1x11x11x16xf32, #tpu.memory_space<vmem>>, vector<1x8x8x16xf32>
    %93 = vector.shape_cast %92 : vector<1x8x8x16xf32> to vector<8x8x16xf32>
    %94 = vector.shape_cast %93 : vector<8x8x16xf32> to vector<64x16xf32>
    %c224 = arith.constant 224 : index
    %c0_98 = arith.constant 0 : index
    %95 = vector.load %arg2[%c224, %c0_98] : memref<256x128xf32, #tpu.memory_space<vmem>>, vector<16x128xf32>
    %cst_99 = arith.constant dense<0.000000e+00> : vector<64x128xf32>
    %96 = tpu.matmul %94, %95, %cst_99 {dimension_numbers = #tpu.dot_dimension_numbers<[1], [0], [0], [1], [0, 0, 1, 1], [], []>} : vector<64x16xf32>, vector<16x128xf32>, vector<64x128xf32> -> vector<64x128xf32>
    %97 = arith.addf %91, %96 : vector<64x128xf32>
    %c0_100 = arith.constant 0 : index
    %c3_101 = arith.constant 3 : index
    %c3_102 = arith.constant 3 : index
    %c0_103 = arith.constant 0 : index
    %98 = vector.load %arg1[%c0_100, %c3_101, %c3_102, %c0_103] : memref<1x11x11x16xf32, #tpu.memory_space<vmem>>, vector<1x8x8x16xf32>
    %99 = vector.shape_cast %98 : vector<1x8x8x16xf32> to vector<8x8x16xf32>
    %100 = vector.shape_cast %99 : vector<8x8x16xf32> to vector<64x16xf32>
    %c240 = arith.constant 240 : index
    %c0_104 = arith.constant 0 : index
    %101 = vector.load %arg2[%c240, %c0_104] : memref<256x128xf32, #tpu.memory_space<vmem>>, vector<16x128xf32>
    %cst_105 = arith.constant dense<0.000000e+00> : vector<64x128xf32>
    %102 = tpu.matmul %100, %101, %cst_105 {dimension_numbers = #tpu.dot_dimension_numbers<[1], [0], [0], [1], [0, 0, 1, 1], [], []>} : vector<64x16xf32>, vector<16x128xf32>, vector<64x128xf32> -> vector<64x128xf32>
    %103 = arith.addf %97, %102 : vector<64x128xf32>
    %104 = vector.broadcast %0 : vector<1x128xf32> to vector<64x128xf32>
    %105 = arith.addf %103, %104 : vector<64x128xf32>
    %106 = arith.negf %105 : vector<64x128xf32>
    %107 = math.exp %106 : vector<64x128xf32>
    %cst_106 = arith.constant 1.000000e+00 : f32
    %108 = vector.broadcast %cst_106 : f32 to vector<64x128xf32>
    %109 = arith.addf %108, %107 : vector<64x128xf32>
    %110 = arith.divf %108, %109 : vector<64x128xf32>
    %111 = arith.mulf %105, %110 : vector<64x128xf32>
    %112 = vector.shape_cast %111 : vector<64x128xf32> to vector<8x8x128xf32>
    %c0_107 = arith.constant 0 : index
    %c1_108 = arith.constant 1 : index
    %c0_109 = arith.constant 0 : index
    %113 = vector.load %arg5[%c0_107, %c1_108, %c0_109] : memref<8x9x128xf32, #tpu.memory_space<vmem>>, vector<8x8x128xf32>
    tpu.vector_store %arg5[%c0_107, %c1_108, %c0_109], %112 {strides = array<i32>} : memref<8x9x128xf32, #tpu.memory_space<vmem>>, vector<8x8x128xf32>,
    %c0_110 = arith.constant 0 : index
    %c0_111 = arith.constant 0 : index
    %c0_112 = arith.constant 0 : index
    %114 = tpu.strided_load %arg5[%c0_110, %c0_111, %c0_112] {strides = array<i32: 1, 2, 1>} : memref<8x9x128xf32, #tpu.memory_space<vmem>>, vector<8x4x128xf32>
    %c0_113 = arith.constant 0 : index
    %c1_114 = arith.constant 1 : index
    %c0_115 = arith.constant 0 : index
    %115 = tpu.strided_load %arg5[%c0_113, %c1_114, %c0_115] {strides = array<i32: 1, 2, 1>} : memref<8x9x128xf32, #tpu.memory_space<vmem>>, vector<8x4x128xf32>
    %c0_116 = arith.constant 0 : index
    %c2_117 = arith.constant 2 : index
    %c0_118 = arith.constant 0 : index
    %116 = tpu.strided_load %arg5[%c0_116, %c2_117, %c0_118] {strides = array<i32: 1, 2, 1>} : memref<8x9x128xf32, #tpu.memory_space<vmem>>, vector<8x4x128xf32>
    %117 = arith.maximumf %114, %115 : vector<8x4x128xf32>
    %118 = arith.maximumf %117, %116 : vector<8x4x128xf32>
    %c1_119 = arith.constant 1 : index
    %c0_120 = arith.constant 0 : index
    %c0_121 = arith.constant 0 : index
    %119 = vector.load %arg6[%c1_119, %c0_120, %c0_121] : memref<10x4x128xf32, #tpu.memory_space<vmem>>, vector<8x4x128xf32>
    tpu.vector_store %arg6[%c1_119, %c0_120, %c0_121], %118 {strides = array<i32>} : memref<10x4x128xf32, #tpu.memory_space<vmem>>, vector<8x4x128xf32>,
    %c0_122 = arith.constant 0 : index
    %c0_123 = arith.constant 0 : index
    %c0_124 = arith.constant 0 : index
    %120 = vector.load %arg6[%c0_122, %c0_123, %c0_124] : memref<10x4x128xf32, #tpu.memory_space<vmem>>, vector<8x4x128xf32>
    %121 = vector.shape_cast %120 : vector<8x4x128xf32> to vector<4x2x4x128xf32>
    %c2_125 = arith.constant 2 : index
    %c0_126 = arith.constant 0 : index
    %c0_127 = arith.constant 0 : index
    %122 = vector.load %arg6[%c2_125, %c0_126, %c0_127] : memref<10x4x128xf32, #tpu.memory_space<vmem>>, vector<8x4x128xf32>
    %123 = vector.shape_cast %122 : vector<8x4x128xf32> to vector<4x2x4x128xf32>
    %124 = vector.extract_strided_slice %121 {offsets = [0, 0, 0, 0], sizes = [4, 1, 4, 128], strides = [1, 1, 1, 1]} : vector<4x2x4x128xf32> to vector<4x1x4x128xf32>
    %125 = vector.shape_cast %124 : vector<4x1x4x128xf32> to vector<4x4x128xf32>
    %126 = vector.extract_strided_slice %121 {offsets = [0, 1, 0, 0], sizes = [4, 1, 4, 128], strides = [1, 1, 1, 1]} : vector<4x2x4x128xf32> to vector<4x1x4x128xf32>
    %127 = vector.shape_cast %126 : vector<4x1x4x128xf32> to vector<4x4x128xf32>
    %128 = arith.maximumf %125, %127 : vector<4x4x128xf32>
    %129 = vector.extract_strided_slice %123 {offsets = [0, 0, 0, 0], sizes = [4, 1, 4, 128], strides = [1, 1, 1, 1]} : vector<4x2x4x128xf32> to vector<4x1x4x128xf32>
    %130 = vector.shape_cast %129 : vector<4x1x4x128xf32> to vector<4x4x128xf32>
    %131 = arith.maximumf %128, %130 : vector<4x4x128xf32>
    %c0_128 = arith.constant 0 : index
    %c0_129 = arith.constant 0 : index
    %c0_130 = arith.constant 0 : index
    %c0_131 = arith.constant 0 : index
    %132 = vector.load %arg4[%c0_128, %c0_129, %c0_130, %c0_131] : memref<1x4x4x128xf32, #tpu.memory_space<vmem>>, vector<1x4x4x128xf32>
    %133 = vector.shape_cast %132 : vector<1x4x4x128xf32> to vector<4x4x128xf32>
    %134 = vector.shape_cast %131 : vector<4x4x128xf32> to vector<1x4x4x128xf32>
    tpu.vector_store %arg4[%c0_128, %c0_129, %c0_130, %c0_131], %134 {strides = array<i32>} : memref<1x4x4x128xf32, #tpu.memory_space<vmem>>, vector<1x4x4x128xf32>,
    return
  }
  func.func @transform_0(%arg0: i32) -> (i32, i32, i32, i32) {
    %c0_i32 = arith.constant 0 : i32
    %c0_i32_0 = arith.constant 0 : i32
    %c0_i32_1 = arith.constant 0 : i32
    %c0_i32_2 = arith.constant 0 : i32
    return %arg0, %c0_i32, %c0_i32_0, %c0_i32_1 : i32, i32, i32, i32
  }
  func.func @transform_1(%arg0: i32) -> (i32, i32) {
    %c0_i32 = arith.constant 0 : i32
    %c0_i32_0 = arith.constant 0 : i32
    %c0_i32_1 = arith.constant 0 : i32
    return %c0_i32, %c0_i32_0 : i32, i32
  }
  func.func @transform_2(%arg0: i32) -> (i32, i32) {
    %c0_i32 = arith.constant 0 : i32
    %c0_i32_0 = arith.constant 0 : i32
    %c0_i32_1 = arith.constant 0 : i32
    return %c0_i32, %c0_i32_0 : i32, i32
  }
  func.func @transform_3(%arg0: i32) -> (i32, i32, i32, i32) {
    %c0_i32 = arith.constant 0 : i32
    %c0_i32_0 = arith.constant 0 : i32
    %c0_i32_1 = arith.constant 0 : i32
    %c0_i32_2 = arith.constant 0 : i32
    return %arg0, %c0_i32, %c0_i32_0, %c0_i32_1 : i32, i32, i32, i32
  }
}

</mosaic_0001>

<llo_original>
// kernel: basic_stem.1
$region0: #{basic_stem.1}
  #allocation0 [shape = 'u32[]', space=smem, size = 0x4, offset = 0x4, fixed_abs, tag = 'smem constant byte address 0x4 - core index']
  #allocation1 [shape = 'u32[72,128]{1,0:T(1,128)}', space=vmem, size = 0x9000, scoped, tag = 'internal scratch']
  #allocation2 [shape = 'f32[8,9,128]{2,1,0:T(8,128)}', space=vmem, size = 0x10000, scoped, tag = 'scratch operand']
  #allocation3 [shape = 'f32[10,4,128]{2,1,0:T(4,128)}', space=vmem, size = 0x5000, scoped, tag = 'scratch operand']
  %s0 = inlined_call_operand.vmem [shape: f32[2,11,11,16], index: 0, kind: input, shape index: {}]
  %s1 = inlined_call_operand.vmem [shape: f32[256,128], index: 1, kind: input, shape index: {}]
  %s2 = inlined_call_operand.vmem [shape: f32[1,128], index: 2, kind: input, shape index: {}]
  %s3 = inlined_call_operand.vmem [shape: f32[2,4,4,128], index: 3, kind: output, shape index: {}]
  %s4 = sld [smem:[#allocation0]]
  $region45: #{basic_stem.1} parent=0
    _
  %s6 = ssub.s32 1, %s4
  %s7 = scalar_select 0, %s6, %s4
  loop: start=0, step=1, limit=4
  $region2: #{basic_stem.1} parent=0 // loop_pre_header
    _
  $region3: #{basic_stem.1} parent=0 // loop_header
    %s9 = sphi 0, %s13
    %p10 = scmp.ge.s32.totalorder %s9, 4
    %s19 = sphi 0, %s21
    %s22 = sphi 0, %s19
    %s23 = sphi 0, %s22
    %s39 = sphi 0, %s23
    %s43 = sphi 0, %s43
    %s45 = sphi 0, %s43
    %s46 = sphi 0, %s45
    %s60 = sphi 0, %s46
    %s64 = sphi 0, %s64
    %s66 = sphi 0, %s64
    %s67 = sphi 0, %s66
    %s81 = sphi 0, %s67
    %s87 = sphi 0, %s89
    %s90 = sphi 0, %s87
    %s91 = sphi 0, %s90
    %s107 = sphi 0, %s91
  $region4: #{basic_stem.1} parent=0 // loop_header_branch
    %12 = sbr.rel (%p10) target = $region8
  $region5: #{basic_stem.1} parent=0 // loop_body
    %s14 = ssub.s32 %s9, 1
    %s15 = ssub.s32 %s9, 2
    %s16 = sadd.s32 %s9, 1
    %s17 = ssub.s32 %s9, %s16
    %p18 = scmp.eq.s32.totalorder %s17, 0
    %s20 = sadd.s32 %s19, 1
    %s21 = scalar_select %p18, %s19, %s20
    %p24 = pneg %p18
    %p25 = scmp.eq.s32.totalorder %s9, 1
    %p26 = por %p24, %p25
    %p27 = scmp.ne.s32.totalorder %s19, %s22
    %p28 = scmp.eq.s32.totalorder %s9, 0
    %p29 = por %p27, %p28
    %p30 = scmp.ne.s32.totalorder %s19, %s22
    %p31 = scmp.eq.s32.totalorder %s14, 1
    %p32 = por %p30, %p31
    %p33 = scmp.ne.s32.totalorder %s22, %s23
    %p34 = scmp.eq.s32.totalorder %s14, 0
    %p35 = por %p33, %p34
    %p36 = scmp.ne.s32.totalorder %s22, %s23
    %p37 = scmp.eq.s32.totalorder %s15, 1
    %p38 = por %p36, %p37
    %p40 = scmp.ne.s32.totalorder %s23, %s39
    %p41 = scmp.eq.s32.totalorder %s15, 0
    %p42 = por %p40, %p41
    %s44 = sadd.s32 %s43, 1
    %p47 = scmp.eq.s32.totalorder %s9, 1
    %p48 = scmp.ne.s32.totalorder %s43, %s45
    %p49 = scmp.eq.s32.totalorder %s9, 0
    %p50 = por %p48, %p49
    %p51 = scmp.ne.s32.totalorder %s43, %s45
    %p52 = scmp.eq.s32.totalorder %s14, 1
    %p53 = por %p51, %p52
    %p54 = scmp.ne.s32.totalorder %s45, %s46
    %p55 = scmp.eq.s32.totalorder %s14, 0
    %p56 = por %p54, %p55
    %p57 = scmp.ne.s32.totalorder %s45, %s46
    %p58 = scmp.eq.s32.totalorder %s15, 1
    %p59 = por %p57, %p58
    %p61 = scmp.ne.s32.totalorder %s46, %s60
    %p62 = scmp.eq.s32.totalorder %s15, 0
    %p63 = por %p61, %p62
    %s65 = sadd.s32 %s64, 1
    %p68 = scmp.eq.s32.totalorder %s9, 1
    %p69 = scmp.ne.s32.totalorder %s64, %s66
    %p70 = scmp.eq.s32.totalorder %s9, 0
    %p71 = por %p69, %p70
    %p72 = scmp.ne.s32.totalorder %s64, %s66
    %p73 = scmp.eq.s32.totalorder %s14, 1
    %p74 = por %p72, %p73
    %p75 = scmp.ne.s32.totalorder %s66, %s67
    %p76 = scmp.eq.s32.totalorder %s14, 0
    %p77 = por %p75, %p76
    %p78 = scmp.ne.s32.totalorder %s66, %s67
    %p79 = scmp.eq.s32.totalorder %s15, 1
    %p80 = por %p78, %p79
    %p82 = scmp.ne.s32.totalorder %s67, %s81
    %p83 = scmp.eq.s32.totalorder %s15, 0
    %p84 = por %p82, %p83
    %s85 = ssub.s32 %s9, %s16
    %p86 = scmp.eq.s32.totalorder %s85, 0
    %s88 = sadd.s32 %s87, 1
    %s89 = scalar_select %p86, %s87, %s88
    %p92 = pneg %p86
    %p93 = scmp.eq.s32.totalorder %s9, 1
    %p94 = por %p92, %p93
    %p95 = scmp.ne.s32.totalorder %s87, %s90
    %p96 = scmp.eq.s32.totalorder %s9, 0
    %p97 = por %p95, %p96
    %p98 = scmp.ne.s32.totalorder %s87, %s90
    %p99 = scmp.eq.s32.totalorder %s14, 1
    %p100 = por %p98, %p99
    %p101 = scmp.ne.s32.totalorder %s90, %s91
    %p102 = scmp.eq.s32.totalorder %s14, 0
    %p103 = por %p101, %p102
    %p104 = scmp.ne.s32.totalorder %s90, %s91
    %p105 = scmp.eq.s32.totalorder %s15, 1
    %p106 = por %p104, %p105
    %p108 = scmp.ne.s32.totalorder %s91, %s107
    %p109 = scmp.eq.s32.totalorder %s15, 0
    %p110 = por %p108, %p109
    %p111 = scmp.le.s32.totalorder 1, %s9
    %p112 = scmp.lt.s32.totalorder %s9, 3
    %p113 = pnand %p111, %p112
    %p114 = pneg %p113
    // Predicated region
    $region9: #{basic_stem.1} parent=5 // pred_check
      _
    $region10: #{basic_stem.1} parent=5 // pred_check_branch
      %116 = sbr.rel (%p113) target = $region12
    $region11: #{basic_stem.1} parent=5 // pred_region
      %s117 = ssub.s32 %s9, 1
      // Predicated region
      $region13: #{basic_stem.1} parent=11 // pred_check
        %p118 = pneg %p56
      $region14: #{basic_stem.1} parent=11 // pred_check_branch
        %120 = sbr.rel (%p118) target = $region16
      $region15: #{basic_stem.1} parent=11 // pred_region
        _
      $region16: #{basic_stem.1} parent=11 // pred_fallthru
        _
      // Predicated region
      $region17: #{basic_stem.1} parent=11 // pred_check
        %p121 = pneg %p77
      $region18: #{basic_stem.1} parent=11 // pred_check_branch
        %123 = sbr.rel (%p121) target = $region20
      $region19: #{basic_stem.1} parent=11 // pred_region
        _
      $region20: #{basic_stem.1} parent=11 // pred_fallthru
        _
    $region12: #{basic_stem.1} parent=5 // pred_fallthru
      _
    %p124 = scmp.lt.s32.totalorder %s9, 2
    // Predicated region
    $region21: #{basic_stem.1} parent=5 // pred_check
      %p125 = pneg %p124
    $region22: #{basic_stem.1} parent=5 // pred_check_branch
      %127 = sbr.rel (%p125) target = $region24
    $region23: #{basic_stem.1} parent=5 // pred_region
      // Predicated region
      $region25: #{basic_stem.1} parent=23 // pred_check
        %p128 = pneg %p29
      $region26: #{basic_stem.1} parent=23 // pred_check_branch
        %130 = sbr.rel (%p128) target = $region28
      $region27: #{basic_stem.1} parent=23 // pred_region
        %p131 = scmp.lt.s32.totalorder %s9, 1
        %s132 = scalar_select %p131, %s9, 1
        %s133 = smul.addr %s132, 22
        %s134 = smul.addr %s133, 8
        %s135 = scalar_lea.vmem %s0, %s134
      $region28: #{basic_stem.1} parent=23 // pred_fallthru
        _
    $region24: #{basic_stem.1} parent=5 // pred_fallthru
      _
    %p136 = scmp.le.s32.totalorder 1, %s9
    %p137 = scmp.lt.s32.totalorder %s9, 3
    %p138 = pnand %p136, %p137
    %p139 = pneg %p138
    // Predicated region
    $region29: #{basic_stem.1} parent=5 // pred_check
      _
    $region30: #{basic_stem.1} parent=5 // pred_check_branch
      %141 = sbr.rel (%p138) target = $region32
    $region31: #{basic_stem.1} parent=5 // pred_region
      %s142 = ssub.s32 %s9, 1
      %p143 = scmp.lt.s32.totalorder %s14, 1
      %s144 = scalar_select %p143, %s14, 1
      %s145 = smul.addr %s144, 22
      %s146 = smul.addr %s145, 8
      %s147 = scalar_lea.vmem %s0, %s146
      %p148 = pneg %p35
      %p149 = pneg %p32
      %p150 = pneg %p56
      %p151 = pneg %p53
      %p152 = pneg %p77
      %p153 = pneg %p74
      %p154 = pneg %p103
      %p155 = pneg %p100
      %p156 = scmp.lt.s32.totalorder %s14, 1
      %s157 = scalar_select %p156, %s14, 1
      %s158 = smul.addr %s157, 4
      %s159 = smul.addr %s158, 4
      %s160 = scalar_lea.vmem %s3, %s159
      %p161 = scmp.lt.s32.totalorder %s14, 1
      %s162 = scalar_select %p161, %s14, 1
      %s163 = smul.addr %s162, 22
      %s164 = smul.addr %s163, 8
      %s165 = scalar_lea.vmem %s0, %s164
      %p166 = scmp.lt.s32.totalorder %s14, 1
      %s167 = scalar_select %p166, %s14, 1
      %s168 = smul.addr %s167, 4
      %s169 = smul.addr %s168, 4
      %s170 = scalar_lea.vmem %s3, %s169
      %v171 = vld [vmem:[%s2] sm:$0x1]
      %172 = vst [vmem:[#allocation2] sm:$0x1] -inf
      %173 = vst [vmem:[#allocation2 + $0x10] sm:$0x1] -inf
      %174 = vst [vmem:[#allocation2 + $0x20] sm:$0x1] -inf
      %175 = vst [vmem:[#allocation2 + $0x30] sm:$0x1] -inf
      %176 = vst [vmem:[#allocation2 + $0x40] sm:$0x1] -inf
      %177 = vst [vmem:[#allocation2 + $0x50] sm:$0x1] -inf
      %178 = vst [vmem:[#allocation2 + $0x60] sm:$0x1] -inf
      %179 = vst [vmem:[#allocation2 + $0x70] sm:$0x1] -inf
      %180 = vst [vmem:[#allocation3] sm:$0xf] -inf
      %s181 = scalar_lea.vmem [#allocation3], 36
      %182 = vst [vmem:[%s181] sm:$0xf] -inf
      %v183 = vld [vmem:[%s165] sm:$0xff]
      %v184 = vld [vmem:[%s165 + $0x10] sm:$0xff]
      %v185 = vld [vmem:[%s165 + $0x20] sm:$0xff]
      %v186 = vld [vmem:[%s165 + $0x30] sm:$0xff]
      %v187 = vld [vmem:[%s165 + $0x40] sm:$0xff]
      %v188 = vld [vmem:[%s165 + $0x50] sm:$0xff]
      %v189 = vld [vmem:[%s165 + $0x60] sm:$0xff]
      %v190 = vld [vmem:[%s165 + $0x70] sm:$0xff]
      %v191 = vld [vmem:[%s1] sm:$0xff]
      %v192 = vld [vmem:[%s1 + $0x8] sm:$0xff]
      %v193 = vld [vmem:[%s165 + $0x1] sm:$0xff]
      %v194 = vld [vmem:[%s165 + $0x11] sm:$0xff]
      %v195 = vld [vmem:[%s165 + $0x21] sm:$0xff]
      %v196 = vld [vmem:[%s165 + $0x31] sm:$0xff]
      %v197 = vld [vmem:[%s165 + $0x41] sm:$0xff]
      %v198 = vld [vmem:[%s165 + $0x51] sm:$0xff]
      %v199 = vld [vmem:[%s165 + $0x61] sm:$0xff]
      %v200 = vld [vmem:[%s165 + $0x71] sm:$0xff]
      %v201 = vld [vmem:[%s1 + $0x10] sm:$0xff]
      %v202 = vld [vmem:[%s1 + $0x18] sm:$0xff]
      %vm203 = vcmask 130048
      %v205 = vsel %vm203, %v193, 0
      %v208 = vsel %vm203, %v194, 0
      %v211 = vsel %vm203, %v195, 0
      %v214 = vsel %vm203, %v196, 0
      %v217 = vsel %vm203, %v197, 0
      %v220 = vsel %vm203, %v198, 0
      %v223 = vsel %vm203, %v199, 0
      %v226 = vsel %vm203, %v200, 0
      %228 = vmatpush.msra.mxu0 0.0
      %229 = vmatpush.msra.mxu0 0.0
      %230 = vmatpush.msra.mxu0 0.0
      %231 = vmatpush.msra.mxu0 0.0
      %232 = vmatpush.msra.mxu0 0.0
      %233 = vmatpush.msra.mxu0 0.0
      %234 = vmatpush.msra.mxu0 0.0
      %235 = vmatpush.msra.mxu0 0.0
      %236 = vmatpush.msra.mxu0 0.0
      %237 = vmatpush.msra.mxu0 0.0
      %238 = vmatpush.msra.mxu0 0.0
      %239 = vmatpush.msra.mxu0 0.0
      %240 = vmatpush.msra.mxu0 0.0
      %241 = vmatpush.msra.mxu0 0.0
      %242 = vmatpush.msra.mxu0 %v202
      %243 = vmatpush.msra.mxu0 %v201
      %244 = vmatmul.f32.gmra.mxu0 %v205
      %v245 = vpop.f32.mrf.mxu0
      %v246 = vadd.f32 0.0, %v245
      %247 = vmatmul.f32.gmra.mxu0 %v208
      %v248 = vpop.f32.mrf.mxu0
      %v249 = vadd.f32 0.0, %v248
      %250 = vmatmul.f32.gmra.mxu0 %v211
      %v251 = vpop.f32.mrf.mxu0
      %v252 = vadd.f32 0.0, %v251
      %253 = vmatmul.f32.gmra.mxu0 %v214
      %v254 = vpop.f32.mrf.mxu0
      %v255 = vadd.f32 0.0, %v254
      %256 = vmatmul.f32.gmra.mxu0 %v217
      %v257 = vpop.f32.mrf.mxu0
      %v258 = vadd.f32 0.0, %v257
      %259 = vmatmul.f32.gmra.mxu0 %v220
      %v260 = vpop.f32.mrf.mxu0
      %v261 = vadd.f32 0.0, %v260
      %262 = vmatmul.f32.gmra.mxu0 %v223
      %v263 = vpop.f32.mrf.mxu0
      %v264 = vadd.f32 0.0, %v263
      %265 = vmatmul.f32.gmra.mxu0 %v226
      %v266 = vpop.f32.mrf.mxu0
      %v267 = vadd.f32 0.0, %v266
      %268 = vdwg.mxu0
      %v270 = vsel %vm203, %v183, 0
      %v273 = vsel %vm203, %v184, 0
      %v276 = vsel %vm203, %v185, 0
      %v279 = vsel %vm203, %v186, 0
      %v282 = vsel %vm203, %v187, 0
      %v285 = vsel %vm203, %v188, 0
      %v288 = vsel %vm203, %v189, 0
      %v291 = vsel %vm203, %v190, 0
      %293 = vmatpush.msra.mxu0 0.0
      %294 = vmatpush.msra.mxu0 0.0
      %295 = vmatpush.msra.mxu0 0.0
      %296 = vmatpush.msra.mxu0 0.0
      %297 = vmatpush.msra.mxu0 0.0
      %298 = vmatpush.msra.mxu0 0.0
      %299 = vmatpush.msra.mxu0 0.0
      %300 = vmatpush.msra.mxu0 0.0
      %301 = vmatpush.msra.mxu0 0.0
      %302 = vmatpush.msra.mxu0 0.0
      %303 = vmatpush.msra.mxu0 0.0
      %304 = vmatpush.msra.mxu0 0.0
      %305 = vmatpush.msra.mxu0 0.0
      %306 = vmatpush.msra.mxu0 0.0
      %307 = vmatpush.msra.mxu0 %v192
      %308 = vmatpush.msra.mxu0 %v191
      %309 = vmatmul.f32.gmra.mxu0 %v270
      %v310 = vpop.f32.mrf.mxu0
      %v311 = vadd.f32 %v246, %v310
      %312 = vmatmul.f32.gmra.mxu0 %v273
      %v313 = vpop.f32.mrf.mxu0
      %v314 = vadd.f32 %v249, %v313
      %315 = vmatmul.f32.gmra.mxu0 %v276
      %v316 = vpop.f32.mrf.mxu0
      %v317 = vadd.f32 %v252, %v316
      %318 = vmatmul.f32.gmra.mxu0 %v279
      %v319 = vpop.f32.mrf.mxu0
      %v320 = vadd.f32 %v255, %v319
      %321 = vmatmul.f32.gmra.mxu0 %v282
      %v322 = vpop.f32.mrf.mxu0
      %v323 = vadd.f32 %v258, %v322
      %324 = vmatmul.f32.gmra.mxu0 %v285
      %v325 = vpop.f32.mrf.mxu0
      %v326 = vadd.f32 %v261, %v325
      %327 = vmatmul.f32.gmra.mxu0 %v288
      %v328 = vpop.f32.mrf.mxu0
      %v329 = vadd.f32 %v264, %v328
      %330 = vmatmul.f32.gmra.mxu0 %v291
      %v331 = vpop.f32.mrf.mxu0
      %v332 = vadd.f32 %v267, %v331
      %333 = vdwg.mxu0
      %v334 = vld [vmem:[%s165 + $0x2] sm:$0xff]
      %v335 = vld [vmem:[%s165 + $0x12] sm:$0xff]
      %v336 = vld [vmem:[%s165 + $0x22] sm:$0xff]
      %v337 = vld [vmem:[%s165 + $0x32] sm:$0xff]
      %v338 = vld [vmem:[%s165 + $0x42] sm:$0xff]
      %v339 = vld [vmem:[%s165 + $0x52] sm:$0xff]
      %v340 = vld [vmem:[%s165 + $0x62] sm:$0xff]
      %v341 = vld [vmem:[%s165 + $0x72] sm:$0xff]
      %v342 = vld [vmem:[%s1 + $0x20] sm:$0xff]
      %v343 = vld [vmem:[%s1 + $0x28] sm:$0xff]
      %v345 = vsel %vm203, %v334, 0
      %v348 = vsel %vm203, %v335, 0
      %v351 = vsel %vm203, %v336, 0
      %v354 = vsel %vm203, %v337, 0
      %v357 = vsel %vm203, %v338, 0
      %v360 = vsel %vm203, %v339, 0
      %v363 = vsel %vm203, %v340, 0
      %v366 = vsel %vm203, %v341, 0
      %368 = vmatpush.msra.mxu0 0.0
      %369 = vmatpush.msra.mxu0 0.0
      %370 = vmatpush.msra.mxu0 0.0
      %371 = vmatpush.msra.mxu0 0.0
      %372 = vmatpush.msra.mxu0 0.0
      %373 = vmatpush.msra.mxu0 0.0
      %374 = vmatpush.msra.mxu0 0.0
      %375 = vmatpush.msra.mxu0 0.0
      %376 = vmatpush.msra.mxu0 0.0
      %377 = vmatpush.msra.mxu0 0.0
      %378 = vmatpush.msra.mxu0 0.0
      %379 = vmatpush.msra.mxu0 0.0
      %380 = vmatpush.msra.mxu0 0.0
      %381 = vmatpush.msra.mxu0 0.0
      %382 = vmatpush.msra.mxu0 %v343
      %383 = vmatpush.msra.mxu0 %v342
      %384 = vmatmul.f32.gmra.mxu0 %v345
      %v385 = vpop.f32.mrf.mxu0
      %v386 = vadd.f32 0.0, %v385
      %387 = vmatmul.f32.gmra.mxu0 %v348
      %v388 = vpop.f32.mrf.mxu0
      %v389 = vadd.f32 0.0, %v388
      %390 = vmatmul.f32.gmra.mxu0 %v351
      %v391 = vpop.f32.mrf.mxu0
      %v392 = vadd.f32 0.0, %v391
      %393 = vmatmul.f32.gmra.mxu0 %v354
      %v394 = vpop.f32.mrf.mxu0
      %v395 = vadd.f32 0.0, %v394
      %396 = vmatmul.f32.gmra.mxu0 %v357
      %v397 = vpop.f32.mrf.mxu0
      %v398 = vadd.f32 0.0, %v397
      %399 = vmatmul.f32.gmra.mxu0 %v360
      %v400 = vpop.f32.mrf.mxu0
      %v401 = vadd.f32 0.0, %v400
      %402 = vmatmul.f32.gmra.mxu0 %v363
      %v403 = vpop.f32.mrf.mxu0
      %v404 = vadd.f32 0.0, %v403
      %405 = vmatmul.f32.gmra.mxu0 %v366
      %v406 = vpop.f32.mrf.mxu0
      %v407 = vadd.f32 0.0, %v406
      %408 = vdwg.mxu0
      %v409 = vadd.f32 %v311, %v386
      %v410 = vadd.f32 %v314, %v389
      %v411 = vadd.f32 %v317, %v392
      %v412 = vadd.f32 %v320, %v395
      %v413 = vadd.f32 %v323, %v398
      %v414 = vadd.f32 %v326, %v401
      %v415 = vadd.f32 %v329, %v404
      %v416 = vadd.f32 %v332, %v407
      %v417 = vld [vmem:[%s165 + $0x3] sm:$0xff]
      %v418 = vld [vmem:[%s165 + $0x13] sm:$0xff]
      %v419 = vld [vmem:[%s165 + $0x23] sm:$0xff]
      %v420 = vld [vmem:[%s165 + $0x33] sm:$0xff]
      %v421 = vld [vmem:[%s165 + $0x43] sm:$0xff]
      %v422 = vld [vmem:[%s165 + $0x53] sm:$0xff]
      %v423 = vld [vmem:[%s165 + $0x63] sm:$0xff]
      %v424 = vld [vmem:[%s165 + $0x73] sm:$0xff]
      %v425 = vld [vmem:[%s1 + $0x30] sm:$0xff]
      %v426 = vld [vmem:[%s1 + $0x38] sm:$0xff]
      %v428 = vsel %vm203, %v417, 0
      %v431 = vsel %vm203, %v418, 0
      %v434 = vsel %vm203, %v419, 0
      %v437 = vsel %vm203, %v420, 0
      %v440 = vsel %vm203, %v421, 0
      %v443 = vsel %vm203, %v422, 0
      %v446 = vsel %vm203, %v423, 0
      %v449 = vsel %vm203, %v424, 0
      %451 = vmatpush.msra.mxu0 0.0
      %452 = vmatpush.msra.mxu0 0.0
      %453 = vmatpush.msra.mxu0 0.0
      %454 = vmatpush.msra.mxu0 0.0
      %455 = vmatpush.msra.mxu0 0.0
      %456 = vmatpush.msra.mxu0 0.0
      %457 = vmatpush.msra.mxu0 0.0
      %458 = vmatpush.msra.mxu0 0.0
      %459 = vmatpush.msra.mxu0 0.0
      %460 = vmatpush.msra.mxu0 0.0
      %461 = vmatpush.msra.mxu0 0.0
      %462 = vmatpush.msra.mxu0 0.0
      %463 = vmatpush.msra.mxu0 0.0
      %464 = vmatpush.msra.mxu0 0.0
      %465 = vmatpush.msra.mxu0 %v426
      %466 = vmatpush.msra.mxu0 %v425
      %467 = vmatmul.f32.gmra.mxu0 %v428
      %v468 = vpop.f32.mrf.mxu0
      %v469 = vadd.f32 0.0, %v468
      %470 = vmatmul.f32.gmra.mxu0 %v431
      %v471 = vpop.f32.mrf.mxu0
      %v472 = vadd.f32 0.0, %v471
      %473 = vmatmul.f32.gmra.mxu0 %v434
      %v474 = vpop.f32.mrf.mxu0
      %v475 = vadd.f32 0.0, %v474
      %476 = vmatmul.f32.gmra.mxu0 %v437
      %v477 = vpop.f32.mrf.mxu0
      %v478 = vadd.f32 0.0, %v477
      %479 = vmatmul.f32.gmra.mxu0 %v440
      %v480 = vpop.f32.mrf.mxu0
      %v481 = vadd.f32 0.0, %v480
      %482 = vmatmul.f32.gmra.mxu0 %v443
      %v483 = vpop.f32.mrf.mxu0
      %v484 = vadd.f32 0.0, %v483
      %485 = vmatmul.f32.gmra.mxu0 %v446
      %v486 = vpop.f32.mrf.mxu0
      %v487 = vadd.f32 0.0, %v486
      %488 = vmatmul.f32.gmra.mxu0 %v449
      %v489 = vpop.f32.mrf.mxu0
      %v490 = vadd.f32 0.0, %v489
      %491 = vdwg.mxu0
      %v492 = vadd.f32 %v409, %v469
      %v493 = vadd.f32 %v410, %v472
      %v494 = vadd.f32 %v411, %v475
      %v495 = vadd.f32 %v412, %v478
      %v496 = vadd.f32 %v413, %v481
      %v497 = vadd.f32 %v414, %v484
      %v498 = vadd.f32 %v415, %v487
      %v499 = vadd.f32 %v416, %v490
      %s500 = scalar_lea.vmem %s165, 16
      %v501 = vld [vmem:[%s500] sm:$0xff]
      %v502 = vld [vmem:[%s500 + $0x10] sm:$0xff]
      %v503 = vld [vmem:[%s500 + $0x20] sm:$0xff]
      %v504 = vld [vmem:[%s500 + $0x30] sm:$0xff]
      %v505 = vld [vmem:[%s500 + $0x40] sm:$0xff]
      %v506 = vld [vmem:[%s500 + $0x50] sm:$0xff]
      %v507 = vld [vmem:[%s500 + $0x60] sm:$0xff]
      %v508 = vld [vmem:[%s500 + $0x70] sm:$0xff]
      %v509 = vld [vmem:[%s1 + $0x40] sm:$0xff]
      %v510 = vld [vmem:[%s1 + $0x48] sm:$0xff]
      %v512 = vsel %vm203, %v501, 0
      %v515 = vsel %vm203, %v502, 0
      %v518 = vsel %vm203, %v503, 0
      %v521 = vsel %vm203, %v504, 0
      %v524 = vsel %vm203, %v505, 0
      %v527 = vsel %vm203, %v506, 0
      %v530 = vsel %vm203, %v507, 0
      %v533 = vsel %vm203, %v508, 0
      %535 = vmatpush.msra.mxu0 0.0
      %536 = vmatpush.msra.mxu0 0.0
      %537 = vmatpush.msra.mxu0 0.0
      %538 = vmatpush.msra.mxu0 0.0
      %539 = vmatpush.msra.mxu0 0.0
      %540 = vmatpush.msra.mxu0 0.0
      %541 = vmatpush.msra.mxu0 0.0
      %542 = vmatpush.msra.mxu0 0.0
      %543 = vmatpush.msra.mxu0 0.0
      %544 = vmatpush.msra.mxu0 0.0
      %545 = vmatpush.msra.mxu0 0.0
      %546 = vmatpush.msra.mxu0 0.0
      %547 = vmatpush.msra.mxu0 0.0
      %548 = vmatpush.msra.mxu0 0.0
      %549 = vmatpush.msra.mxu0 %v510
      %550 = vmatpush.msra.mxu0 %v509
      %551 = vmatmul.f32.gmra.mxu0 %v512
      %v552 = vpop.f32.mrf.mxu0
      %v553 = vadd.f32 0.0, %v552
      %554 = vmatmul.f32.gmra.mxu0 %v515
      %v555 = vpop.f32.mrf.mxu0
      %v556 = vadd.f32 0.0, %v555
      %557 = vmatmul.f32.gmra.mxu0 %v518
      %v558 = vpop.f32.mrf.mxu0
      %v559 = vadd.f32 0.0, %v558
      %560 = vmatmul.f32.gmra.mxu0 %v521
      %v561 = vpop.f32.mrf.mxu0
      %v562 = vadd.f32 0.0, %v561
      %563 = vmatmul.f32.gmra.mxu0 %v524
      %v564 = vpop.f32.mrf.mxu0
      %v565 = vadd.f32 0.0, %v564
      %566 = vmatmul.f32.gmra.mxu0 %v527
      %v567 = vpop.f32.mrf.mxu0
      %v568 = vadd.f32 0.0, %v567
      %569 = vmatmul.f32.gmra.mxu0 %v530
      %v570 = vpop.f32.mrf.mxu0
      %v571 = vadd.f32 0.0, %v570
      %572 = vmatmul.f32.gmra.mxu0 %v533
      %v573 = vpop.f32.mrf.mxu0
      %v574 = vadd.f32 0.0, %v573
      %575 = vdwg.mxu0
      %v576 = vadd.f32 %v492, %v553
      %v577 = vadd.f32 %v493, %v556
      %v578 = vadd.f32 %v494, %v559
      %v579 = vadd.f32 %v495, %v562
      %v580 = vadd.f32 %v496, %v565
      %v581 = vadd.f32 %v497, %v568
      %v582 = vadd.f32 %v498, %v571
      %v583 = vadd.f32 %v499, %v574
      %v584 = vld [vmem:[%s500 + $0x1] sm:$0xff]
      %v585 = vld [vmem:[%s500 + $0x11] sm:$0xff]
      %v586 = vld [vmem:[%s500 + $0x21] sm:$0xff]
      %v587 = vld [vmem:[%s500 + $0x31] sm:$0xff]
      %v588 = vld [vmem:[%s500 + $0x41] sm:$0xff]
      %v589 = vld [vmem:[%s500 + $0x51] sm:$0xff]
      %v590 = vld [vmem:[%s500 + $0x61] sm:$0xff]
      %v591 = vld [vmem:[%s500 + $0x71] sm:$0xff]
      %v592 = vld [vmem:[%s1 + $0x50] sm:$0xff]
      %v593 = vld [vmem:[%s1 + $0x58] sm:$0xff]
      %v595 = vsel %vm203, %v584, 0
      %v598 = vsel %vm203, %v585, 0
      %v601 = vsel %vm203, %v586, 0
      %v604 = vsel %vm203, %v587, 0
      %v607 = vsel %vm203, %v588, 0
      %v610 = vsel %vm203, %v589, 0
      %v613 = vsel %vm203, %v590, 0
      %v616 = vsel %vm203, %v591, 0
      %618 = vmatpush.msra.mxu0 0.0
      %619 = vmatpush.msra.mxu0 0.0
      %620 = vmatpush.msra.mxu0 0.0
      %621 = vmatpush.msra.mxu0 0.0
      %622 = vmatpush.msra.mxu0 0.0
      %623 = vmatpush.msra.mxu0 0.0
      %624 = vmatpush.msra.mxu0 0.0
      %625 = vmatpush.msra.mxu0 0.0
      %626 = vmatpush.msra.mxu0 0.0
      %627 = vmatpush.msra.mxu0 0.0
      %628 = vmatpush.msra.mxu0 0.0
      %629 = vmatpush.msra.mxu0 0.0
      %630 = vmatpush.msra.mxu0 0.0
      %631 = vmatpush.msra.mxu0 0.0
      %632 = vmatpush.msra.mxu0 %v593
      %633 = vmatpush.msra.mxu0 %v592
      %634 = vmatmul.f32.gmra.mxu0 %v595
      %v635 = vpop.f32.mrf.mxu0
      %v636 = vadd.f32 0.0, %v635
      %637 = vmatmul.f32.gmra.mxu0 %v598
      %v638 = vpop.f32.mrf.mxu0
      %v639 = vadd.f32 0.0, %v638
      %640 = vmatmul.f32.gmra.mxu0 %v601
      %v641 = vpop.f32.mrf.mxu0
      %v642 = vadd.f32 0.0, %v641
      %643 = vmatmul.f32.gmra.mxu0 %v604
      %v644 = vpop.f32.mrf.mxu0
      %v645 = vadd.f32 0.0, %v644
      %646 = vmatmul.f32.gmra.mxu0 %v607
      %v647 = vpop.f32.mrf.mxu0
      %v648 = vadd.f32 0.0, %v647
      %649 = vmatmul.f32.gmra.mxu0 %v610
      %v650 = vpop.f32.mrf.mxu0
      %v651 = vadd.f32 0.0, %v650
      %652 = vmatmul.f32.gmra.mxu0 %v613
      %v653 = vpop.f32.mrf.mxu0
      %v654 = vadd.f32 0.0, %v653
      %655 = vmatmul.f32.gmra.mxu0 %v616
      %v656 = vpop.f32.mrf.mxu0
      %v657 = vadd.f32 0.0, %v656
      %658 = vdwg.mxu0
      %v659 = vadd.f32 %v576, %v636
      %v660 = vadd.f32 %v577, %v639
      %v661 = vadd.f32 %v578, %v642
      %v662 = vadd.f32 %v579, %v645
      %v663 = vadd.f32 %v580, %v648
      %v664 = vadd.f32 %v581, %v651
      %v665 = vadd.f32 %v582, %v654
      %v666 = vadd.f32 %v583, %v657
      %v667 = vld [vmem:[%s500 + $0x2] sm:$0xff]
      %v668 = vld [vmem:[%s500 + $0x12] sm:$0xff]
      %v669 = vld [vmem:[%s500 + $0x22] sm:$0xff]
      %v670 = vld [vmem:[%s500 + $0x32] sm:$0xff]
      %v671 = vld [vmem:[%s500 + $0x42] sm:$0xff]
      %v672 = vld [vmem:[%s500 + $0x52] sm:$0xff]
      %v673 = vld [vmem:[%s500 + $0x62] sm:$0xff]
      %v674 = vld [vmem:[%s500 + $0x72] sm:$0xff]
      %v675 = vld [vmem:[%s1 + $0x60] sm:$0xff]
      %v676 = vld [vmem:[%s1 + $0x68] sm:$0xff]
      %v678 = vsel %vm203, %v667, 0
      %v681 = vsel %vm203, %v668, 0
      %v684 = vsel %vm203, %v669, 0
      %v687 = vsel %vm203, %v670, 0
      %v690 = vsel %vm203, %v671, 0
      %v693 = vsel %vm203, %v672, 0
      %v696 = vsel %vm203, %v673, 0
      %v699 = vsel %vm203, %v674, 0
      %701 = vmatpush.msra.mxu0 0.0
      %702 = vmatpush.msra.mxu0 0.0
      %703 = vmatpush.msra.mxu0 0.0
      %704 = vmatpush.msra.mxu0 0.0
      %705 = vmatpush.msra.mxu0 0.0
      %706 = vmatpush.msra.mxu0 0.0
      %707 = vmatpush.msra.mxu0 0.0
      %708 = vmatpush.msra.mxu0 0.0
      %709 = vmatpush.msra.mxu0 0.0
      %710 = vmatpush.msra.mxu0 0.0
      %711 = vmatpush.msra.mxu0 0.0
      %712 = vmatpush.msra.mxu0 0.0
      %713 = vmatpush.msra.mxu0 0.0
      %714 = vmatpush.msra.mxu0 0.0
      %715 = vmatpush.msra.mxu0 %v676
      %716 = vmatpush.msra.mxu0 %v675
      %717 = vmatmul.f32.gmra.mxu0 %v678
      %v718 = vpop.f32.mrf.mxu0
      %v719 = vadd.f32 0.0, %v718
      %720 = vmatmul.f32.gmra.mxu0 %v681
      %v721 = vpop.f32.mrf.mxu0
      %v722 = vadd.f32 0.0, %v721
      %723 = vmatmul.f32.gmra.mxu0 %v684
      %v724 = vpop.f32.mrf.mxu0
      %v725 = vadd.f32 0.0, %v724
      %726 = vmatmul.f32.gmra.mxu0 %v687
      %v727 = vpop.f32.mrf.mxu0
      %v728 = vadd.f32 0.0, %v727
      %729 = vmatmul.f32.gmra.mxu0 %v690
      %v730 = vpop.f32.mrf.mxu0
      %v731 = vadd.f32 0.0, %v730
      %732 = vmatmul.f32.gmra.mxu0 %v693
      %v733 = vpop.f32.mrf.mxu0
      %v734 = vadd.f32 0.0, %v733
      %735 = vmatmul.f32.gmra.mxu0 %v696
      %v736 = vpop.f32.mrf.mxu0
      %v737 = vadd.f32 0.0, %v736
      %738 = vmatmul.f32.gmra.mxu0 %v699
      %v739 = vpop.f32.mrf.mxu0
      %v740 = vadd.f32 0.0, %v739
      %741 = vdwg.mxu0
      %v742 = vadd.f32 %v659, %v719
      %v743 = vadd.f32 %v660, %v722
      %v744 = vadd.f32 %v661, %v725
      %v745 = vadd.f32 %v662, %v728
      %v746 = vadd.f32 %v663, %v731
      %v747 = vadd.f32 %v664, %v734
      %v748 = vadd.f32 %v665, %v737
      %v749 = vadd.f32 %v666, %v740
      %v750 = vld [vmem:[%s500 + $0x3] sm:$0xff]
      %v751 = vld [vmem:[%s500 + $0x13] sm:$0xff]
      %v752 = vld [vmem:[%s500 + $0x23] sm:$0xff]
      %v753 = vld [vmem:[%s500 + $0x33] sm:$0xff]
      %v754 = vld [vmem:[%s500 + $0x43] sm:$0xff]
      %v755 = vld [vmem:[%s500 + $0x53] sm:$0xff]
      %v756 = vld [vmem:[%s500 + $0x63] sm:$0xff]
      %v757 = vld [vmem:[%s500 + $0x73] sm:$0xff]
      %v758 = vld [vmem:[%s1 + $0x70] sm:$0xff]
      %v759 = vld [vmem:[%s1 + $0x78] sm:$0xff]
      %v761 = vsel %vm203, %v750, 0
      %v764 = vsel %vm203, %v751, 0
      %v767 = vsel %vm203, %v752, 0
      %v770 = vsel %vm203, %v753, 0
      %v773 = vsel %vm203, %v754, 0
      %v776 = vsel %vm203, %v755, 0
      %v779 = vsel %vm203, %v756, 0
      %v782 = vsel %vm203, %v757, 0
      %784 = vmatpush.msra.mxu0 0.0
      %785 = vmatpush.msra.mxu0 0.0
      %786 = vmatpush.msra.mxu0 0.0
      %787 = vmatpush.msra.mxu0 0.0
      %788 = vmatpush.msra.mxu0 0.0
      %789 = vmatpush.msra.mxu0 0.0
      %790 = vmatpush.msra.mxu0 0.0
      %791 = vmatpush.msra.mxu0 0.0
      %792 = vmatpush.msra.mxu0 0.0
      %793 = vmatpush.msra.mxu0 0.0
      %794 = vmatpush.msra.mxu0 0.0
      %795 = vmatpush.msra.mxu0 0.0
      %796 = vmatpush.msra.mxu0 0.0
      %797 = vmatpush.msra.mxu0 0.0
      %798 = vmatpush.msra.mxu0 %v759
      %799 = vmatpush.msra.mxu0 %v758
      %800 = vmatmul.f32.gmra.mxu0 %v761
      %v801 = vpop.f32.mrf.mxu0
      %v802 = vadd.f32 0.0, %v801
      %803 = vmatmul.f32.gmra.mxu0 %v764
      %v804 = vpop.f32.mrf.mxu0
      %v805 = vadd.f32 0.0, %v804
      %806 = vmatmul.f32.gmra.mxu0 %v767
      %v807 = vpop.f32.mrf.mxu0
      %v808 = vadd.f32 0.0, %v807
      %809 = vmatmul.f32.gmra.mxu0 %v770
      %v810 = vpop.f32.mrf.mxu0
      %v811 = vadd.f32 0.0, %v810
      %812 = vmatmul.f32.gmra.mxu0 %v773
      %v813 = vpop.f32.mrf.mxu0
      %v814 = vadd.f32 0.0, %v813
      %815 = vmatmul.f32.gmra.mxu0 %v776
      %v816 = vpop.f32.mrf.mxu0
      %v817 = vadd.f32 0.0, %v816
      %818 = vmatmul.f32.gmra.mxu0 %v779
      %v819 = vpop.f32.mrf.mxu0
      %v820 = vadd.f32 0.0, %v819
      %821 = vmatmul.f32.gmra.mxu0 %v782
      %v822 = vpop.f32.mrf.mxu0
      %v823 = vadd.f32 0.0, %v822
      %824 = vdwg.mxu0
      %v825 = vadd.f32 %v742, %v802
      %v826 = vadd.f32 %v743, %v805
      %v827 = vadd.f32 %v744, %v808
      %v828 = vadd.f32 %v745, %v811
      %v829 = vadd.f32 %v746, %v814
      %v830 = vadd.f32 %v747, %v817
      %v831 = vadd.f32 %v748, %v820
      %v832 = vadd.f32 %v749, %v823
      %s833 = scalar_lea.vmem %s165, 32
      %v834 = vld [vmem:[%s833] sm:$0xff]
      %v835 = vld [vmem:[%s833 + $0x10] sm:$0xff]
      %v836 = vld [vmem:[%s833 + $0x20] sm:$0xff]
      %v837 = vld [vmem:[%s833 + $0x30] sm:$0xff]
      %v838 = vld [vmem:[%s833 + $0x40] sm:$0xff]
      %v839 = vld [vmem:[%s833 + $0x50] sm:$0xff]
      %v840 = vld [vmem:[%s833 + $0x60] sm:$0xff]
      %v841 = vld [vmem:[%s833 + $0x70] sm:$0xff]
      %v842 = vld [vmem:[%s1 + $0x80] sm:$0xff]
      %v843 = vld [vmem:[%s1 + $0x88] sm:$0xff]
      %v845 = vsel %vm203, %v834, 0
      %v848 = vsel %vm203, %v835, 0
      %v851 = vsel %vm203, %v836, 0
      %v854 = vsel %vm203, %v837, 0
      %v857 = vsel %vm203, %v838, 0
      %v860 = vsel %vm203, %v839, 0
      %v863 = vsel %vm203, %v840, 0
      %v866 = vsel %vm203, %v841, 0
      %868 = vmatpush.msra.mxu0 0.0
      %869 = vmatpush.msra.mxu0 0.0
      %870 = vmatpush.msra.mxu0 0.0
      %871 = vmatpush.msra.mxu0 0.0
      %872 = vmatpush.msra.mxu0 0.0
      %873 = vmatpush.msra.mxu0 0.0
      %874 = vmatpush.msra.mxu0 0.0
      %875 = vmatpush.msra.mxu0 0.0
      %876 = vmatpush.msra.mxu0 0.0
      %877 = vmatpush.msra.mxu0 0.0
      %878 = vmatpush.msra.mxu0 0.0
      %879 = vmatpush.msra.mxu0 0.0
      %880 = vmatpush.msra.mxu0 0.0
      %881 = vmatpush.msra.mxu0 0.0
      %882 = vmatpush.msra.mxu0 %v843
      %883 = vmatpush.msra.mxu0 %v842
      %884 = vmatmul.f32.gmra.mxu0 %v845
      %v885 = vpop.f32.mrf.mxu0
      %v886 = vadd.f32 0.0, %v885
      %887 = vmatmul.f32.gmra.mxu0 %v848
      %v888 = vpop.f32.mrf.mxu0
      %v889 = vadd.f32 0.0, %v888
      %890 = vmatmul.f32.gmra.mxu0 %v851
      %v891 = vpop.f32.mrf.mxu0
      %v892 = vadd.f32 0.0, %v891
      %893 = vmatmul.f32.gmra.mxu0 %v854
      %v894 = vpop.f32.mrf.mxu0
      %v895 = vadd.f32 0.0, %v894
      %896 = vmatmul.f32.gmra.mxu0 %v857
      %v897 = vpop.f32.mrf.mxu0
      %v898 = vadd.f32 0.0, %v897
      %899 = vmatmul.f32.gmra.mxu0 %v860
      %v900 = vpop.f32.mrf.mxu0
      %v901 = vadd.f32 0.0, %v900
      %902 = vmatmul.f32.gmra.mxu0 %v863
      %v903 = vpop.f32.mrf.mxu0
      %v904 = vadd.f32 0.0, %v903
      %905 = vmatmul.f32.gmra.mxu0 %v866
      %v906 = vpop.f32.mrf.mxu0
      %v907 = vadd.f32 0.0, %v906
      %908 = vdwg.mxu0
      %v909 = vadd.f32 %v825, %v886
      %v910 = vadd.f32 %v826, %v889
      %v911 = vadd.f32 %v827, %v892
      %v912 = vadd.f32 %v828, %v895
      %v913 = vadd.f32 %v829, %v898
      %v914 = vadd.f32 %v830, %v901
      %v915 = vadd.f32 %v831, %v904
      %v916 = vadd.f32 %v832, %v907
      %v917 = vld [vmem:[%s833 + $0x1] sm:$0xff]
      %v918 = vld [vmem:[%s833 + $0x11] sm:$0xff]
      %v919 = vld [vmem:[%s833 + $0x21] sm:$0xff]
      %v920 = vld [vmem:[%s833 + $0x31] sm:$0xff]
      %v921 = vld [vmem:[%s833 + $0x41] sm:$0xff]
      %v922 = vld [vmem:[%s833 + $0x51] sm:$0xff]
      %v923 = vld [vmem:[%s833 + $0x61] sm:$0xff]
      %v924 = vld [vmem:[%s833 + $0x71] sm:$0xff]
      %v925 = vld [vmem:[%s1 + $0x90] sm:$0xff]
      %v926 = vld [vmem:[%s1 + $0x98] sm:$0xff]
      %v928 = vsel %vm203, %v917, 0
      %v931 = vsel %vm203, %v918, 0
      %v934 = vsel %vm203, %v919, 0
      %v937 = vsel %vm203, %v920, 0
      %v940 = vsel %vm203, %v921, 0
      %v943 = vsel %vm203, %v922, 0
      %v946 = vsel %vm203, %v923, 0
      %v949 = vsel %vm203, %v924, 0
      %951 = vmatpush.msra.mxu0 0.0
      %952 = vmatpush.msra.mxu0 0.0
      %953 = vmatpush.msra.mxu0 0.0
      %954 = vmatpush.msra.mxu0 0.0
      %955 = vmatpush.msra.mxu0 0.0
      %956 = vmatpush.msra.mxu0 0.0
      %957 = vmatpush.msra.mxu0 0.0
      %958 = vmatpush.msra.mxu0 0.0
      %959 = vmatpush.msra.mxu0 0.0
      %960 = vmatpush.msra.mxu0 0.0
      %961 = vmatpush.msra.mxu0 0.0
      %962 = vmatpush.msra.mxu0 0.0
      %963 = vmatpush.msra.mxu0 0.0
      %964 = vmatpush.msra.mxu0 0.0
      %965 = vmatpush.msra.mxu0 %v926
      %966 = vmatpush.msra.mxu0 %v925
      %967 = vmatmul.f32.gmra.mxu0 %v928
      %v968 = vpop.f32.mrf.mxu0
      %v969 = vadd.f32 0.0, %v968
      %970 = vmatmul.f32.gmra.mxu0 %v931
      %v971 = vpop.f32.mrf.mxu0
      %v972 = vadd.f32 0.0, %v971
      %973 = vmatmul.f32.gmra.mxu0 %v934
      %v974 = vpop.f32.mrf.mxu0
      %v975 = vadd.f32 0.0, %v974
      %976 = vmatmul.f32.gmra.mxu0 %v937
      %v977 = vpop.f32.mrf.mxu0
      %v978 = vadd.f32 0.0, %v977
      %979 = vmatmul.f32.gmra.mxu0 %v940
      %v980 = vpop.f32.mrf.mxu0
      %v981 = vadd.f32 0.0, %v980
      %982 = vmatmul.f32.gmra.mxu0 %v943
      %v983 = vpop.f32.mrf.mxu0
      %v984 = vadd.f32 0.0, %v983
      %985 = vmatmul.f32.gmra.mxu0 %v946
      %v986 = vpop.f32.mrf.mxu0
      %v987 = vadd.f32 0.0, %v986
      %988 = vmatmul.f32.gmra.mxu0 %v949
      %v989 = vpop.f32.mrf.mxu0
      %v990 = vadd.f32 0.0, %v989
      %991 = vdwg.mxu0
      %v992 = vadd.f32 %v909, %v969
      %v993 = vadd.f32 %v910, %v972
      %v994 = vadd.f32 %v911, %v975
      %v995 = vadd.f32 %v912, %v978
      %v996 = vadd.f32 %v913, %v981
      %v997 = vadd.f32 %v914, %v984
      %v998 = vadd.f32 %v915, %v987
      %v999 = vadd.f32 %v916, %v990
      %v1000 = vld [vmem:[%s833 + $0x2] sm:$0xff]
      %v1001 = vld [vmem:[%s833 + $0x12] sm:$0xff]
      %v1002 = vld [vmem:[%s833 + $0x22] sm:$0xff]
      %v1003 = vld [vmem:[%s833 + $0x32] sm:$0xff]
      %v1004 = vld [vmem:[%s833 + $0x42] sm:$0xff]
      %v1005 = vld [vmem:[%s833 + $0x52] sm:$0xff]
      %v1006 = vld [vmem:[%s833 + $0x62] sm:$0xff]
      %v1007 = vld [vmem:[%s833 + $0x72] sm:$0xff]
      %v1008 = vld [vmem:[%s1 + $0xa0] sm:$0xff]
      %v1009 = vld [vmem:[%s1 + $0xa8] sm:$0xff]
      %v1011 = vsel %vm203, %v1000, 0
      %v1014 = vsel %vm203, %v1001, 0
      %v1017 = vsel %vm203, %v1002, 0
      %v1020 = vsel %vm203, %v1003, 0
      %v1023 = vsel %vm203, %v1004, 0
      %v1026 = vsel %vm203, %v1005, 0
      %v1029 = vsel %vm203, %v1006, 0
      %v1032 = vsel %vm203, %v1007, 0
      %1034 = vmatpush.msra.mxu0 0.0
      %1035 = vmatpush.msra.mxu0 0.0
      %1036 = vmatpush.msra.mxu0 0.0
      %1037 = vmatpush.msra.mxu0 0.0
      %1038 = vmatpush.msra.mxu0 0.0
      %1039 = vmatpush.msra.mxu0 0.0
      %1040 = vmatpush.msra.mxu0 0.0
      %1041 = vmatpush.msra.mxu0 0.0
      %1042 = vmatpush.msra.mxu0 0.0
      %1043 = vmatpush.msra.mxu0 0.0
      %1044 = vmatpush.msra.mxu0 0.0
      %1045 = vmatpush.msra.mxu0 0.0
      %1046 = vmatpush.msra.mxu0 0.0
      %1047 = vmatpush.msra.mxu0 0.0
      %1048 = vmatpush.msra.mxu0 %v1009
      %1049 = vmatpush.msra.mxu0 %v1008
      %1050 = vmatmul.f32.gmra.mxu0 %v1011
      %v1051 = vpop.f32.mrf.mxu0
      %v1052 = vadd.f32 0.0, %v1051
      %1053 = vmatmul.f32.gmra.mxu0 %v1014
      %v1054 = vpop.f32.mrf.mxu0
      %v1055 = vadd.f32 0.0, %v1054
      %1056 = vmatmul.f32.gmra.mxu0 %v1017
      %v1057 = vpop.f32.mrf.mxu0
      %v1058 = vadd.f32 0.0, %v1057
      %1059 = vmatmul.f32.gmra.mxu0 %v1020
      %v1060 = vpop.f32.mrf.mxu0
      %v1061 = vadd.f32 0.0, %v1060
      %1062 = vmatmul.f32.gmra.mxu0 %v1023
      %v1063 = vpop.f32.mrf.mxu0
      %v1064 = vadd.f32 0.0, %v1063
      %1065 = vmatmul.f32.gmra.mxu0 %v1026
      %v1066 = vpop.f32.mrf.mxu0
      %v1067 = vadd.f32 0.0, %v1066
      %1068 = vmatmul.f32.gmra.mxu0 %v1029
      %v1069 = vpop.f32.mrf.mxu0
      %v1070 = vadd.f32 0.0, %v1069
      %1071 = vmatmul.f32.gmra.mxu0 %v1032
      %v1072 = vpop.f32.mrf.mxu0
      %v1073 = vadd.f32 0.0, %v1072
      %1074 = vdwg.mxu0
      %v1075 = vadd.f32 %v992, %v1052
      %v1076 = vadd.f32 %v993, %v1055
      %v1077 = vadd.f32 %v994, %v1058
      %v1078 = vadd.f32 %v995, %v1061
      %v1079 = vadd.f32 %v996, %v1064
      %v1080 = vadd.f32 %v997, %v1067
      %v1081 = vadd.f32 %v998, %v1070
      %v1082 = vadd.f32 %v999, %v1073
      %v1083 = vld [vmem:[%s833 + $0x3] sm:$0xff]
      %v1084 = vld [vmem:[%s833 + $0x13] sm:$0xff]
      %v1085 = vld [vmem:[%s833 + $0x23] sm:$0xff]
      %v1086 = vld [vmem:[%s833 + $0x33] sm:$0xff]
      %v1087 = vld [vmem:[%s833 + $0x43] sm:$0xff]
      %v1088 = vld [vmem:[%s833 + $0x53] sm:$0xff]
      %v1089 = vld [vmem:[%s833 + $0x63] sm:$0xff]
      %v1090 = vld [vmem:[%s833 + $0x73] sm:$0xff]
      %v1091 = vld [vmem:[%s1 + $0xb0] sm:$0xff]
      %v1092 = vld [vmem:[%s1 + $0xb8] sm:$0xff]
      %v1094 = vsel %vm203, %v1083, 0
      %v1097 = vsel %vm203, %v1084, 0
      %v1100 = vsel %vm203, %v1085, 0
      %v1103 = vsel %vm203, %v1086, 0
      %v1106 = vsel %vm203, %v1087, 0
      %v1109 = vsel %vm203, %v1088, 0
      %v1112 = vsel %vm203, %v1089, 0
      %v1115 = vsel %vm203, %v1090, 0
      %1117 = vmatpush.msra.mxu0 0.0
      %1118 = vmatpush.msra.mxu0 0.0
      %1119 = vmatpush.msra.mxu0 0.0
      %1120 = vmatpush.msra.mxu0 0.0
      %1121 = vmatpush.msra.mxu0 0.0
      %1122 = vmatpush.msra.mxu0 0.0
      %1123 = vmatpush.msra.mxu0 0.0
      %1124 = vmatpush.msra.mxu0 0.0
      %1125 = vmatpush.msra.mxu0 0.0
      %1126 = vmatpush.msra.mxu0 0.0
      %1127 = vmatpush.msra.mxu0 0.0
      %1128 = vmatpush.msra.mxu0 0.0
      %1129 = vmatpush.msra.mxu0 0.0
      %1130 = vmatpush.msra.mxu0 0.0
      %1131 = vmatpush.msra.mxu0 %v1092
      %1132 = vmatpush.msra.mxu0 %v1091
      %1133 = vmatmul.f32.gmra.mxu0 %v1094
      %v1134 = vpop.f32.mrf.mxu0
      %v1135 = vadd.f32 0.0, %v1134
      %1136 = vmatmul.f32.gmra.mxu0 %v1097
      %v1137 = vpop.f32.mrf.mxu0
      %v1138 = vadd.f32 0.0, %v1137
      %1139 = vmatmul.f32.gmra.mxu0 %v1100
      %v1140 = vpop.f32.mrf.mxu0
      %v1141 = vadd.f32 0.0, %v1140
      %1142 = vmatmul.f32.gmra.mxu0 %v1103
      %v1143 = vpop.f32.mrf.mxu0
      %v1144 = vadd.f32 0.0, %v1143
      %1145 = vmatmul.f32.gmra.mxu0 %v1106
      %v1146 = vpop.f32.mrf.mxu0
      %v1147 = vadd.f32 0.0, %v1146
      %1148 = vmatmul.f32.gmra.mxu0 %v1109
      %v1149 = vpop.f32.mrf.mxu0
      %v1150 = vadd.f32 0.0, %v1149
      %1151 = vmatmul.f32.gmra.mxu0 %v1112
      %v1152 = vpop.f32.mrf.mxu0
      %v1153 = vadd.f32 0.0, %v1152
      %1154 = vmatmul.f32.gmra.mxu0 %v1115
      %v1155 = vpop.f32.mrf.mxu0
      %v1156 = vadd.f32 0.0, %v1155
      %1157 = vdwg.mxu0
      %v1158 = vadd.f32 %v1075, %v1135
      %v1159 = vadd.f32 %v1076, %v1138
      %v1160 = vadd.f32 %v1077, %v1141
      %v1161 = vadd.f32 %v1078, %v1144
      %v1162 = vadd.f32 %v1079, %v1147
      %v1163 = vadd.f32 %v1080, %v1150
      %v1164 = vadd.f32 %v1081, %v1153
      %v1165 = vadd.f32 %v1082, %v1156
      %s1166 = scalar_lea.vmem %s165, 48
      %v1167 = vld [vmem:[%s1166] sm:$0xff]
      %v1168 = vld [vmem:[%s1166 + $0x10] sm:$0xff]
      %v1169 = vld [vmem:[%s1166 + $0x20] sm:$0xff]
      %v1170 = vld [vmem:[%s1166 + $0x30] sm:$0xff]
      %v1171 = vld [vmem:[%s1166 + $0x40] sm:$0xff]
      %v1172 = vld [vmem:[%s1166 + $0x50] sm:$0xff]
      %v1173 = vld [vmem:[%s1166 + $0x60] sm:$0xff]
      %v1174 = vld [vmem:[%s1166 + $0x70] sm:$0xff]
      %v1175 = vld [vmem:[%s1 + $0xc0] sm:$0xff]
      %v1176 = vld [vmem:[%s1 + $0xc8] sm:$0xff]
      %v1178 = vsel %vm203, %v1167, 0
      %v1181 = vsel %vm203, %v1168, 0
      %v1184 = vsel %vm203, %v1169, 0
      %v1187 = vsel %vm203, %v1170, 0
      %v1190 = vsel %vm203, %v1171, 0
      %v1193 = vsel %vm203, %v1172, 0
      %v1196 = vsel %vm203, %v1173, 0
      %v1199 = vsel %vm203, %v1174, 0
      %1201 = vmatpush.msra.mxu0 0.0
      %1202 = vmatpush.msra.mxu0 0.0
      %1203 = vmatpush.msra.mxu0 0.0
      %1204 = vmatpush.msra.mxu0 0.0
      %1205 = vmatpush.msra.mxu0 0.0
      %1206 = vmatpush.msra.mxu0 0.0
      %1207 = vmatpush.msra.mxu0 0.0
      %1208 = vmatpush.msra.mxu0 0.0
      %1209 = vmatpush.msra.mxu0 0.0
      %1210 = vmatpush.msra.mxu0 0.0
      %1211 = vmatpush.msra.mxu0 0.0
      %1212 = vmatpush.msra.mxu0 0.0
      %1213 = vmatpush.msra.mxu0 0.0
      %1214 = vmatpush.msra.mxu0 0.0
      %1215 = vmatpush.msra.mxu0 %v1176
      %1216 = vmatpush.msra.mxu0 %v1175
      %1217 = vmatmul.f32.gmra.mxu0 %v1178
      %v1218 = vpop.f32.mrf.mxu0
      %v1219 = vadd.f32 0.0, %v1218
      %1220 = vmatmul.f32.gmra.mxu0 %v1181
      %v1221 = vpop.f32.mrf.mxu0
      %v1222 = vadd.f32 0.0, %v1221
      %1223 = vmatmul.f32.gmra.mxu0 %v1184
      %v1224 = vpop.f32.mrf.mxu0
      %v1225 = vadd.f32 0.0, %v1224
      %1226 = vmatmul.f32.gmra.mxu0 %v1187
      %v1227 = vpop.f32.mrf.mxu0
      %v1228 = vadd.f32 0.0, %v1227
      %1229 = vmatmul.f32.gmra.mxu0 %v1190
      %v1230 = vpop.f32.mrf.mxu0
      %v1231 = vadd.f32 0.0, %v1230
      %1232 = vmatmul.f32.gmra.mxu0 %v1193
      %v1233 = vpop.f32.mrf.mxu0
      %v1234 = vadd.f32 0.0, %v1233
      %1235 = vmatmul.f32.gmra.mxu0 %v1196
      %v1236 = vpop.f32.mrf.mxu0
      %v1237 = vadd.f32 0.0, %v1236
      %1238 = vmatmul.f32.gmra.mxu0 %v1199
      %v1239 = vpop.f32.mrf.mxu0
      %v1240 = vadd.f32 0.0, %v1239
      %1241 = vdwg.mxu0
      %v1242 = vadd.f32 %v1158, %v1219
      %v1243 = vadd.f32 %v1159, %v1222
      %v1244 = vadd.f32 %v1160, %v1225
      %v1245 = vadd.f32 %v1161, %v1228
      %v1246 = vadd.f32 %v1162, %v1231
      %v1247 = vadd.f32 %v1163, %v1234
      %v1248 = vadd.f32 %v1164, %v1237
      %v1249 = vadd.f32 %v1165, %v1240
      %v1250 = vld [vmem:[%s1166 + $0x1] sm:$0xff]
      %v1251 = vld [vmem:[%s1166 + $0x11] sm:$0xff]
      %v1252 = vld [vmem:[%s1166 + $0x21] sm:$0xff]
      %v1253 = vld [vmem:[%s1166 + $0x31] sm:$0xff]
      %v1254 = vld [vmem:[%s1166 + $0x41] sm:$0xff]
      %v1255 = vld [vmem:[%s1166 + $0x51] sm:$0xff]
      %v1256 = vld [vmem:[%s1166 + $0x61] sm:$0xff]
      %v1257 = vld [vmem:[%s1166 + $0x71] sm:$0xff]
      %v1258 = vld [vmem:[%s1 + $0xd0] sm:$0xff]
      %v1259 = vld [vmem:[%s1 + $0xd8] sm:$0xff]
      %v1261 = vsel %vm203, %v1250, 0
      %v1264 = vsel %vm203, %v1251, 0
      %v1267 = vsel %vm203, %v1252, 0
      %v1270 = vsel %vm203, %v1253, 0
      %v1273 = vsel %vm203, %v1254, 0
      %v1276 = vsel %vm203, %v1255, 0
      %v1279 = vsel %vm203, %v1256, 0
      %v1282 = vsel %vm203, %v1257, 0
      %1284 = vmatpush.msra.mxu0 0.0
      %1285 = vmatpush.msra.mxu0 0.0
      %1286 = vmatpush.msra.mxu0 0.0
      %1287 = vmatpush.msra.mxu0 0.0
      %1288 = vmatpush.msra.mxu0 0.0
      %1289 = vmatpush.msra.mxu0 0.0
      %1290 = vmatpush.msra.mxu0 0.0
      %1291 = vmatpush.msra.mxu0 0.0
      %1292 = vmatpush.msra.mxu0 0.0
      %1293 = vmatpush.msra.mxu0 0.0
      %1294 = vmatpush.msra.mxu0 0.0
      %1295 = vmatpush.msra.mxu0 0.0
      %1296 = vmatpush.msra.mxu0 0.0
      %1297 = vmatpush.msra.mxu0 0.0
      %1298 = vmatpush.msra.mxu0 %v1259
      %1299 = vmatpush.msra.mxu0 %v1258
      %1300 = vmatmul.f32.gmra.mxu0 %v1261
      %v1301 = vpop.f32.mrf.mxu0
      %v1302 = vadd.f32 0.0, %v1301
      %1303 = vmatmul.f32.gmra.mxu0 %v1264
      %v1304 = vpop.f32.mrf.mxu0
      %v1305 = vadd.f32 0.0, %v1304
      %1306 = vmatmul.f32.gmra.mxu0 %v1267
      %v1307 = vpop.f32.mrf.mxu0
      %v1308 = vadd.f32 0.0, %v1307
      %1309 = vmatmul.f32.gmra.mxu0 %v1270
      %v1310 = vpop.f32.mrf.mxu0
      %v1311 = vadd.f32 0.0, %v1310
      %1312 = vmatmul.f32.gmra.mxu0 %v1273
      %v1313 = vpop.f32.mrf.mxu0
      %v1314 = vadd.f32 0.0, %v1313
      %1315 = vmatmul.f32.gmra.mxu0 %v1276
      %v1316 = vpop.f32.mrf.mxu0
      %v1317 = vadd.f32 0.0, %v1316
      %1318 = vmatmul.f32.gmra.mxu0 %v1279
      %v1319 = vpop.f32.mrf.mxu0
      %v1320 = vadd.f32 0.0, %v1319
      %1321 = vmatmul.f32.gmra.mxu0 %v1282
      %v1322 = vpop.f32.mrf.mxu0
      %v1323 = vadd.f32 0.0, %v1322
      %1324 = vdwg.mxu0
      %v1325 = vadd.f32 %v1242, %v1302
      %v1326 = vadd.f32 %v1243, %v1305
      %v1327 = vadd.f32 %v1244, %v1308
      %v1328 = vadd.f32 %v1245, %v1311
      %v1329 = vadd.f32 %v1246, %v1314
      %v1330 = vadd.f32 %v1247, %v1317
      %v1331 = vadd.f32 %v1248, %v1320
      %v1332 = vadd.f32 %v1249, %v1323
      %v1333 = vld [vmem:[%s1166 + $0x2] sm:$0xff]
      %v1334 = vld [vmem:[%s1166 + $0x12] sm:$0xff]
      %v1335 = vld [vmem:[%s1166 + $0x22] sm:$0xff]
      %v1336 = vld [vmem:[%s1166 + $0x32] sm:$0xff]
      %v1337 = vld [vmem:[%s1166 + $0x42] sm:$0xff]
      %v1338 = vld [vmem:[%s1166 + $0x52] sm:$0xff]
      %v1339 = vld [vmem:[%s1166 + $0x62] sm:$0xff]
      %v1340 = vld [vmem:[%s1166 + $0x72] sm:$0xff]
      %v1341 = vld [vmem:[%s1 + $0xe0] sm:$0xff]
      %v1342 = vld [vmem:[%s1 + $0xe8] sm:$0xff]
      %v1344 = vsel %vm203, %v1333, 0
      %v1347 = vsel %vm203, %v1334, 0
      %v1350 = vsel %vm203, %v1335, 0
      %v1353 = vsel %vm203, %v1336, 0
      %v1356 = vsel %vm203, %v1337, 0
      %v1359 = vsel %vm203, %v1338, 0
      %v1362 = vsel %vm203, %v1339, 0
      %v1365 = vsel %vm203, %v1340, 0
      %1367 = vmatpush.msra.mxu0 0.0
      %1368 = vmatpush.msra.mxu0 0.0
      %1369 = vmatpush.msra.mxu0 0.0
      %1370 = vmatpush.msra.mxu0 0.0
      %1371 = vmatpush.msra.mxu0 0.0
      %1372 = vmatpush.msra.mxu0 0.0
      %1373 = vmatpush.msra.mxu0 0.0
      %1374 = vmatpush.msra.mxu0 0.0
      %1375 = vmatpush.msra.mxu0 0.0
      %1376 = vmatpush.msra.mxu0 0.0
      %1377 = vmatpush.msra.mxu0 0.0
      %1378 = vmatpush.msra.mxu0 0.0
      %1379 = vmatpush.msra.mxu0 0.0
      %1380 = vmatpush.msra.mxu0 0.0
      %1381 = vmatpush.msra.mxu0 %v1342
      %1382 = vmatpush.msra.mxu0 %v1341
      %1383 = vmatmul.f32.gmra.mxu0 %v1344
      %v1384 = vpop.f32.mrf.mxu0
      %v1385 = vadd.f32 0.0, %v1384
      %1386 = vmatmul.f32.gmra.mxu0 %v1347
      %v1387 = vpop.f32.mrf.mxu0
      %v1388 = vadd.f32 0.0, %v1387
      %1389 = vmatmul.f32.gmra.mxu0 %v1350
      %v1390 = vpop.f32.mrf.mxu0
      %v1391 = vadd.f32 0.0, %v1390
      %1392 = vmatmul.f32.gmra.mxu0 %v1353
      %v1393 = vpop.f32.mrf.mxu0
      %v1394 = vadd.f32 0.0, %v1393
      %1395 = vmatmul.f32.gmra.mxu0 %v1356
      %v1396 = vpop.f32.mrf.mxu0
      %v1397 = vadd.f32 0.0, %v1396
      %1398 = vmatmul.f32.gmra.mxu0 %v1359
      %v1399 = vpop.f32.mrf.mxu0
      %v1400 = vadd.f32 0.0, %v1399
      %1401 = vmatmul.f32.gmra.mxu0 %v1362
      %v1402 = vpop.f32.mrf.mxu0
      %v1403 = vadd.f32 0.0, %v1402
      %1404 = vmatmul.f32.gmra.mxu0 %v1365
      %v1405 = vpop.f32.mrf.mxu0
      %v1406 = vadd.f32 0.0, %v1405
      %1407 = vdwg.mxu0
      %v1408 = vadd.f32 %v1325, %v1385
      %v1409 = vadd.f32 %v1326, %v1388
      %v1410 = vadd.f32 %v1327, %v1391
      %v1411 = vadd.f32 %v1328, %v1394
      %v1412 = vadd.f32 %v1329, %v1397
      %v1413 = vadd.f32 %v1330, %v1400
      %v1414 = vadd.f32 %v1331, %v1403
      %v1415 = vadd.f32 %v1332, %v1406
      %v1416 = vld [vmem:[%s1166 + $0x3] sm:$0xff]
      %v1417 = vld [vmem:[%s1166 + $0x13] sm:$0xff]
      %v1418 = vld [vmem:[%s1166 + $0x23] sm:$0xff]
      %v1419 = vld [vmem:[%s1166 + $0x33] sm:$0xff]
      %v1420 = vld [vmem:[%s1166 + $0x43] sm:$0xff]
      %v1421 = vld [vmem:[%s1166 + $0x53] sm:$0xff]
      %v1422 = vld [vmem:[%s1166 + $0x63] sm:$0xff]
      %v1423 = vld [vmem:[%s1166 + $0x73] sm:$0xff]
      %v1424 = vld [vmem:[%s1 + $0xf0] sm:$0xff]
      %v1425 = vld [vmem:[%s1 + $0xf8] sm:$0xff]
      %v1427 = vsel %vm203, %v1416, 0
      %v1430 = vsel %vm203, %v1417, 0
      %v1433 = vsel %vm203, %v1418, 0
      %v1436 = vsel %vm203, %v1419, 0
      %v1439 = vsel %vm203, %v1420, 0
      %v1442 = vsel %vm203, %v1421, 0
      %v1445 = vsel %vm203, %v1422, 0
      %v1448 = vsel %vm203, %v1423, 0
      %1450 = vmatpush.msra.mxu0 0.0
      %1451 = vmatpush.msra.mxu0 0.0
      %1452 = vmatpush.msra.mxu0 0.0
      %1453 = vmatpush.msra.mxu0 0.0
      %1454 = vmatpush.msra.mxu0 0.0
      %1455 = vmatpush.msra.mxu0 0.0
      %1456 = vmatpush.msra.mxu0 0.0
      %1457 = vmatpush.msra.mxu0 0.0
      %1458 = vmatpush.msra.mxu0 0.0
      %1459 = vmatpush.msra.mxu0 0.0
      %1460 = vmatpush.msra.mxu0 0.0
      %1461 = vmatpush.msra.mxu0 0.0
      %1462 = vmatpush.msra.mxu0 0.0
      %1463 = vmatpush.msra.mxu0 0.0
      %1464 = vmatpush.msra.mxu0 %v1425
      %1465 = vmatpush.msra.mxu0 %v1424
      %1466 = vmatmul.f32.gmra.mxu0 %v1427
      %v1467 = vpop.f32.mrf.mxu0
      %v1468 = vadd.f32 0.0, %v1467
      %1469 = vmatmul.f32.gmra.mxu0 %v1430
      %v1470 = vpop.f32.mrf.mxu0
      %v1471 = vadd.f32 0.0, %v1470
      %1472 = vmatmul.f32.gmra.mxu0 %v1433
      %v1473 = vpop.f32.mrf.mxu0
      %v1474 = vadd.f32 0.0, %v1473
      %1475 = vmatmul.f32.gmra.mxu0 %v1436
      %v1476 = vpop.f32.mrf.mxu0
      %v1477 = vadd.f32 0.0, %v1476
      %1478 = vmatmul.f32.gmra.mxu0 %v1439
      %v1479 = vpop.f32.mrf.mxu0
      %v1480 = vadd.f32 0.0, %v1479
      %1481 = vmatmul.f32.gmra.mxu0 %v1442
      %v1482 = vpop.f32.mrf.mxu0
      %v1483 = vadd.f32 0.0, %v1482
      %1484 = vmatmul.f32.gmra.mxu0 %v1445
      %v1485 = vpop.f32.mrf.mxu0
      %v1486 = vadd.f32 0.0, %v1485
      %1487 = vmatmul.f32.gmra.mxu0 %v1448
      %v1488 = vpop.f32.mrf.mxu0
      %v1489 = vadd.f32 0.0, %v1488
      %1490 = vdwg.mxu0
      %v1491 = vadd.f32 %v1408, %v1468
      %v1492 = vadd.f32 %v1409, %v1471
      %v1493 = vadd.f32 %v1410, %v1474
      %v1494 = vadd.f32 %v1411, %v1477
      %v1495 = vadd.f32 %v1412, %v1480
      %v1496 = vadd.f32 %v1413, %v1483
      %v1497 = vadd.f32 %v1414, %v1486
      %v1498 = vadd.f32 %v1415, %v1489
      %v1500 = vperm.slane %v171, 0
      %v1502 = vadd.f32 %v1491, %v1500
      %v1503 = vadd.f32 %v1492, %v1500
      %v1504 = vadd.f32 %v1493, %v1500
      %v1505 = vadd.f32 %v1494, %v1500
      %v1506 = vadd.f32 %v1495, %v1500
      %v1507 = vadd.f32 %v1496, %v1500
      %v1508 = vadd.f32 %v1497, %v1500
      %v1509 = vadd.f32 %v1498, %v1500
      %v1510 = vxor.u32 %v1502, 2147483648
      %v1511 = vxor.u32 %v1503, 2147483648
      %v1512 = vxor.u32 %v1504, 2147483648
      %v1513 = vxor.u32 %v1505, 2147483648
      %v1514 = vxor.u32 %v1506, 2147483648
      %v1515 = vxor.u32 %v1507, 2147483648
      %v1516 = vxor.u32 %v1508, 2147483648
      %v1517 = vxor.u32 %v1509, 2147483648
      %v1518 = vmul.f32 %v1510, 1.442695
      %v1519 = vpow.pop %v1518
      %v1520 = vmul.f32 %v1511, 1.442695
      %v1521 = vpow.pop %v1520
      %v1522 = vmul.f32 %v1512, 1.442695
      %v1523 = vpow.pop %v1522
      %v1524 = vmul.f32 %v1513, 1.442695
      %v1525 = vpow.pop %v1524
      %v1526 = vmul.f32 %v1514, 1.442695
      %v1527 = vpow.pop %v1526
      %v1528 = vmul.f32 %v1515, 1.442695
      %v1529 = vpow.pop %v1528
      %v1530 = vmul.f32 %v1516, 1.442695
      %v1531 = vpow.pop %v1530
      %v1532 = vmul.f32 %v1517, 1.442695
      %v1533 = vpow.pop %v1532
      %v1534 = vadd.f32 %v1519, 1.0
      %v1535 = vadd.f32 %v1521, 1.0
      %v1536 = vadd.f32 %v1523, 1.0
      %v1537 = vadd.f32 %v1525, 1.0
      %v1538 = vadd.f32 %v1527, 1.0
      %v1539 = vadd.f32 %v1529, 1.0
      %v1540 = vadd.f32 %v1531, 1.0
      %v1541 = vadd.f32 %v1533, 1.0
      %v1542 = vrcp.pop %v1534
      %v1543 = vmul.f32 %v1534, %v1542
      %v1544 = vsub.f32 1.0, %v1543
      %v1545 = vmul.f32 %v1542, %v1544
      %v1546 = vadd.f32 %v1542, %v1545
      %vm1547 = vweird.f32 %v1534
      %vm1548 = vweird.f32 %v1542
      %vm1549 = vmor %vm1547, %vm1548
      %v1550 = vsel %vm1549, %v1542, %v1546
      %v1551 = vand.u32 2147483647, %v1534
      %vm1552 = vcmp.eq.f32.partialorder %v1551, 8.507059e+37
      %v1553 = vand.u32 %v1534, 2147483648
      %v1554 = vor.u32 1.1754944e-38, %v1553
      %v1555 = vsel %vm1552, %v1554, %v1550
      %v1556 = vmul.f32 1.0, %v1555
      %v1557 = vrcp.pop %v1535
      %v1558 = vmul.f32 %v1535, %v1557
      %v1559 = vsub.f32 1.0, %v1558
      %v1560 = vmul.f32 %v1557, %v1559
      %v1561 = vadd.f32 %v1557, %v1560
      %vm1562 = vweird.f32 %v1535
      %vm1563 = vweird.f32 %v1557
      %vm1564 = vmor %vm1562, %vm1563
      %v1565 = vsel %vm1564, %v1557, %v1561
      %v1566 = vand.u32 2147483647, %v1535
      %vm1567 = vcmp.eq.f32.partialorder %v1566, 8.507059e+37
      %v1568 = vand.u32 %v1535, 2147483648
      %v1569 = vor.u32 1.1754944e-38, %v1568
      %v1570 = vsel %vm1567, %v1569, %v1565
      %v1571 = vmul.f32 1.0, %v1570
      %v1572 = vrcp.pop %v1536
      %v1573 = vmul.f32 %v1536, %v1572
      %v1574 = vsub.f32 1.0, %v1573
      %v1575 = vmul.f32 %v1572, %v1574
      %v1576 = vadd.f32 %v1572, %v1575
      %vm1577 = vweird.f32 %v1536
      %vm1578 = vweird.f32 %v1572
      %vm1579 = vmor %vm1577, %vm1578
      %v1580 = vsel %vm1579, %v1572, %v1576
      %v1581 = vand.u32 2147483647, %v1536
      %vm1582 = vcmp.eq.f32.partialorder %v1581, 8.507059e+37
      %v1583 = vand.u32 %v1536, 2147483648
      %v1584 = vor.u32 1.1754944e-38, %v1583
      %v1585 = vsel %vm1582, %v1584, %v1580
      %v1586 = vmul.f32 1.0, %v1585
      %v1587 = vrcp.pop %v1537
      %v1588 = vmul.f32 %v1537, %v1587
      %v1589 = vsub.f32 1.0, %v1588
      %v1590 = vmul.f32 %v1587, %v1589
      %v1591 = vadd.f32 %v1587, %v1590
      %vm1592 = vweird.f32 %v1537
      %vm1593 = vweird.f32 %v1587
      %vm1594 = vmor %vm1592, %vm1593
      %v1595 = vsel %vm1594, %v1587, %v1591
      %v1596 = vand.u32 2147483647, %v1537
      %vm1597 = vcmp.eq.f32.partialorder %v1596, 8.507059e+37
      %v1598 = vand.u32 %v1537, 2147483648
      %v1599 = vor.u32 1.1754944e-38, %v1598
      %v1600 = vsel %vm1597, %v1599, %v1595
      %v1601 = vmul.f32 1.0, %v1600
      %v1602 = vrcp.pop %v1538
      %v1603 = vmul.f32 %v1538, %v1602
      %v1604 = vsub.f32 1.0, %v1603
      %v1605 = vmul.f32 %v1602, %v1604
      %v1606 = vadd.f32 %v1602, %v1605
      %vm1607 = vweird.f32 %v1538
      %vm1608 = vweird.f32 %v1602
      %vm1609 = vmor %vm1607, %vm1608
      %v1610 = vsel %vm1609, %v1602, %v1606
      %v1611 = vand.u32 2147483647, %v1538
      %vm1612 = vcmp.eq.f32.partialorder %v1611, 8.507059e+37
      %v1613 = vand.u32 %v1538, 2147483648
      %v1614 = vor.u32 1.1754944e-38, %v1613
      %v1615 = vsel %vm1612, %v1614, %v1610
      %v1616 = vmul.f32 1.0, %v1615
      %v1617 = vrcp.pop %v1539
      %v1618 = vmul.f32 %v1539, %v1617
      %v1619 = vsub.f32 1.0, %v1618
      %v1620 = vmul.f32 %v1617, %v1619
      %v1621 = vadd.f32 %v1617, %v1620
      %vm1622 = vweird.f32 %v1539
      %vm1623 = vweird.f32 %v1617
      %vm1624 = vmor %vm1622, %vm1623
      %v1625 = vsel %vm1624, %v1617, %v1621
      %v1626 = vand.u32 2147483647, %v1539
      %vm1627 = vcmp.eq.f32.partialorder %v1626, 8.507059e+37
      %v1628 = vand.u32 %v1539, 2147483648
      %v1629 = vor.u32 1.1754944e-38, %v1628
      %v1630 = vsel %vm1627, %v1629, %v1625
      %v1631 = vmul.f32 1.0, %v1630
      %v1632 = vrcp.pop %v1540
      %v1633 = vmul.f32 %v1540, %v1632
      %v1634 = vsub.f32 1.0, %v1633
      %v1635 = vmul.f32 %v1632, %v1634
      %v1636 = vadd.f32 %v1632, %v1635
      %vm1637 = vweird.f32 %v1540
      %vm1638 = vweird.f32 %v1632
      %vm1639 = vmor %vm1637, %vm1638
      %v1640 = vsel %vm1639, %v1632, %v1636
      %v1641 = vand.u32 2147483647, %v1540
      %vm1642 = vcmp.eq.f32.partialorder %v1641, 8.507059e+37
      %v1643 = vand.u32 %v1540, 2147483648
      %v1644 = vor.u32 1.1754944e-38, %v1643
      %v1645 = vsel %vm1642, %v1644, %v1640
      %v1646 = vmul.f32 1.0, %v1645
      %v1647 = vrcp.pop %v1541
      %v1648 = vmul.f32 %v1541, %v1647
      %v1649 = vsub.f32 1.0, %v1648
      %v1650 = vmul.f32 %v1647, %v1649
      %v1651 = vadd.f32 %v1647, %v1650
      %vm1652 = vweird.f32 %v1541
      %vm1653 = vweird.f32 %v1647
      %vm1654 = vmor %vm1652, %vm1653
      %v1655 = vsel %vm1654, %v1647, %v1651
      %v1656 = vand.u32 2147483647, %v1541
      %vm1657 = vcmp.eq.f32.partialorder %v1656, 8.507059e+37
      %v1658 = vand.u32 %v1541, 2147483648
      %v1659 = vor.u32 1.1754944e-38, %v1658
      %v1660 = vsel %vm1657, %v1659, %v1655
      %v1661 = vmul.f32 1.0, %v1660
      %v1662 = vmul.f32 %v1502, %v1556
      %v1663 = vmul.f32 %v1503, %v1571
      %v1664 = vmul.f32 %v1504, %v1586
      %v1665 = vmul.f32 %v1505, %v1601
      %v1666 = vmul.f32 %v1506, %v1616
      %v1667 = vmul.f32 %v1507, %v1631
      %v1668 = vmul.f32 %v1508, %v1646
      %v1669 = vmul.f32 %v1509, %v1661
      %1670 = vst [vmem:[#allocation2 + $0x1] sm:$0xff] %v1662
      %1671 = vst [vmem:[#allocation2 + $0x11] sm:$0xff] %v1663
      %1672 = vst [vmem:[#allocation2 + $0x21] sm:$0xff] %v1664
      %1673 = vst [vmem:[#allocation2 + $0x31] sm:$0xff] %v1665
      %1674 = vst [vmem:[#allocation2 + $0x41] sm:$0xff] %v1666
      %1675 = vst [vmem:[#allocation2 + $0x51] sm:$0xff] %v1667
      %1676 = vst [vmem:[#allocation2 + $0x61] sm:$0xff] %v1668
      %1677 = vst [vmem:[#allocation2 + $0x71] sm:$0xff] %v1669
      %v1678 = vld [vmem:[#allocation2] ss:$2 sm:$0xf]
      %s1679 = scalar_lea.vmem [#allocation2], 16
      %v1680 = vld [vmem:[%s1679] ss:$2 sm:$0xf]
      %s1681 = scalar_lea.vmem [#allocation2], 32
      %v1682 = vld [vmem:[%s1681] ss:$2 sm:$0xf]
      %s1683 = scalar_lea.vmem [#allocation2], 48
      %v1684 = vld [vmem:[%s1683] ss:$2 sm:$0xf]
      %s1685 = scalar_lea.vmem [#allocation2], 64
      %v1686 = vld [vmem:[%s1685] ss:$2 sm:$0xf]
      %s1687 = scalar_lea.vmem [#allocation2], 80
      %v1688 = vld [vmem:[%s1687] ss:$2 sm:$0xf]
      %s1689 = scalar_lea.vmem [#allocation2], 96
      %v1690 = vld [vmem:[%s1689] ss:$2 sm:$0xf]
      %s1691 = scalar_lea.vmem [#allocation2], 112
      %v1692 = vld [vmem:[%s1691] ss:$2 sm:$0xf]
      %s1693 = scalar_lea.vmem [#allocation2], 1
      %v1694 = vld [vmem:[%s1693] ss:$2 sm:$0xf]
      %s1695 = scalar_lea.vmem [#allocation2], 17
      %v1696 = vld [vmem:[%s1695] ss:$2 sm:$0xf]
      %s1697 = scalar_lea.vmem [#allocation2], 33
      %v1698 = vld [vmem:[%s1697] ss:$2 sm:$0xf]
      %s1699 = scalar_lea.vmem [#allocation2], 49
      %v1700 = vld [vmem:[%s1699] ss:$2 sm:$0xf]
      %s1701 = scalar_lea.vmem [#allocation2], 65
      %v1702 = vld [vmem:[%s1701] ss:$2 sm:$0xf]
      %s1703 = scalar_lea.vmem [#allocation2], 81
      %v1704 = vld [vmem:[%s1703] ss:$2 sm:$0xf]
      %s1705 = scalar_lea.vmem [#allocation2], 97
      %v1706 = vld [vmem:[%s1705] ss:$2 sm:$0xf]
      %s1707 = scalar_lea.vmem [#allocation2], 113
      %v1708 = vld [vmem:[%s1707] ss:$2 sm:$0xf]
      %s1709 = scalar_lea.vmem [#allocation2], 2
      %v1710 = vld [vmem:[%s1709] ss:$2 sm:$0xf]
      %s1711 = scalar_lea.vmem [#allocation2], 18
      %v1712 = vld [vmem:[%s1711] ss:$2 sm:$0xf]
      %s1713 = scalar_lea.vmem [#allocation2], 34
      %v1714 = vld [vmem:[%s1713] ss:$2 sm:$0xf]
      %s1715 = scalar_lea.vmem [#allocation2], 50
      %v1716 = vld [vmem:[%s1715] ss:$2 sm:$0xf]
      %s1717 = scalar_lea.vmem [#allocation2], 66
      %v1718 = vld [vmem:[%s1717] ss:$2 sm:$0xf]
      %s1719 = scalar_lea.vmem [#allocation2], 82
      %v1720 = vld [vmem:[%s1719] ss:$2 sm:$0xf]
      %s1721 = scalar_lea.vmem [#allocation2], 98
      %v1722 = vld [vmem:[%s1721] ss:$2 sm:$0xf]
      %s1723 = scalar_lea.vmem [#allocation2], 114
      %v1724 = vld [vmem:[%s1723] ss:$2 sm:$0xf]
      %v1725 = vmax.f32 %v1678, %v1694
      %v1726 = vmax.f32 %v1680, %v1696
      %v1727 = vmax.f32 %v1682, %v1698
      %v1728 = vmax.f32 %v1684, %v1700
      %v1729 = vmax.f32 %v1686, %v1702
      %v1730 = vmax.f32 %v1688, %v1704
      %v1731 = vmax.f32 %v1690, %v1706
      %v1732 = vmax.f32 %v1692, %v1708
      %v1733 = vmax.f32 %v1725, %v1710
      %v1734 = vmax.f32 %v1726, %v1712
      %v1735 = vmax.f32 %v1727, %v1714
      %v1736 = vmax.f32 %v1728, %v1716
      %v1737 = vmax.f32 %v1729, %v1718
      %v1738 = vmax.f32 %v1730, %v1720
      %v1739 = vmax.f32 %v1731, %v1722
      %v1740 = vmax.f32 %v1732, %v1724
      %s1741 = scalar_lea.vmem [#allocation3], 4
      %1742 = vst [vmem:[%s1741] sm:$0xf] %v1733
      %1743 = vst [vmem:[%s1741 + $0x4] sm:$0xf] %v1734
      %1744 = vst [vmem:[%s1741 + $0x8] sm:$0xf] %v1735
      %1745 = vst [vmem:[%s1741 + $0xc] sm:$0xf] %v1736
      %1746 = vst [vmem:[%s1741 + $0x10] sm:$0xf] %v1737
      %1747 = vst [vmem:[%s1741 + $0x14] sm:$0xf] %v1738
      %1748 = vst [vmem:[%s1741 + $0x18] sm:$0xf] %v1739
      %1749 = vst [vmem:[%s1741 + $0x1c] sm:$0xf] %v1740
      %v1750 = vld [vmem:[#allocation3] sm:$0xf]
      %v1751 = vld [vmem:[#allocation3 + $0x4] sm:$0xf]
      %v1752 = vld [vmem:[#allocation3 + $0x8] sm:$0xf]
      %v1753 = vld [vmem:[#allocation3 + $0xc] sm:$0xf]
      %v1754 = vld [vmem:[#allocation3 + $0x10] sm:$0xf]
      %v1755 = vld [vmem:[#allocation3 + $0x14] sm:$0xf]
      %v1756 = vld [vmem:[#allocation3 + $0x18] sm:$0xf]
      %v1757 = vld [vmem:[#allocation3 + $0x1c] sm:$0xf]
      %s1758 = scalar_lea.vmem [#allocation3], 8
      %v1759 = vld [vmem:[%s1758] sm:$0xf]
      %v1760 = vld [vmem:[%s1758 + $0x8] sm:$0xf]
      %v1761 = vld [vmem:[%s1758 + $0x10] sm:$0xf]
      %v1762 = vld [vmem:[%s1758 + $0x18] sm:$0xf]
      %v1763 = vmax.f32 %v1750, %v1751
      %v1764 = vmax.f32 %v1752, %v1753
      %v1765 = vmax.f32 %v1754, %v1755
      %v1766 = vmax.f32 %v1756, %v1757
      %v1767 = vmax.f32 %v1763, %v1759
      %v1768 = vmax.f32 %v1764, %v1760
      %v1769 = vmax.f32 %v1765, %v1761
      %v1770 = vmax.f32 %v1766, %v1762
      %1771 = vst [vmem:[%s170] sm:$0xf] %v1767
      %1772 = vst [vmem:[%s170 + $0x4] sm:$0xf] %v1768
      %1773 = vst [vmem:[%s170 + $0x8] sm:$0xf] %v1769
      %1774 = vst [vmem:[%s170 + $0xc] sm:$0xf] %v1770
      %p1775 = scmp.lt.s32.totalorder %s14, 1
      %s1776 = scalar_select %p1775, %s14, 1
      %s1777 = smul.addr %s1776, 4
      %s1778 = smul.addr %s1777, 4
      %s1779 = scalar_lea.vmem %s3, %s1778
      // Predicated region
      $region33: #{basic_stem.1} parent=31 // pred_check
        %p1780 = pneg %p100
      $region34: #{basic_stem.1} parent=31 // pred_check_branch
        %1782 = sbr.rel (%p1780) target = $region36
      $region35: #{basic_stem.1} parent=31 // pred_region
        _
      $region36: #{basic_stem.1} parent=31 // pred_fallthru
        _
    $region32: #{basic_stem.1} parent=5 // pred_fallthru
      _
    %p1783 = scmp.le.s32.totalorder 2, %s9
    // Predicated region
    $region37: #{basic_stem.1} parent=5 // pred_check
      %p1784 = pneg %p1783
    $region38: #{basic_stem.1} parent=5 // pred_check_branch
      %1786 = sbr.rel (%p1784) target = $region40
    $region39: #{basic_stem.1} parent=5 // pred_region
      %s1787 = ssub.s32 %s9, 2
      // Predicated region
      $region41: #{basic_stem.1} parent=39 // pred_check
        %p1788 = pneg %p106
      $region42: #{basic_stem.1} parent=39 // pred_check_branch
        %1790 = sbr.rel (%p1788) target = $region44
      $region43: #{basic_stem.1} parent=39 // pred_region
        %p1791 = scmp.lt.s32.totalorder %s15, 1
        %s1792 = scalar_select %p1791, %s15, 1
        %s1793 = smul.addr %s1792, 4
        %s1794 = smul.addr %s1793, 4
        %s1795 = scalar_lea.vmem %s3, %s1794
      $region44: #{basic_stem.1} parent=39 // pred_fallthru
        _
    $region40: #{basic_stem.1} parent=5 // pred_fallthru
      _
  $region6: #{basic_stem.1} parent=0 // loop_footer
    %s13 = sadd.s32 1, %s9
  $region7: #{basic_stem.1} parent=0 // loop_footer_branch
    %8 = sbr.rel target = $region3
  $region8: #{basic_stem.1} parent=0 // loop_exit
    _

</llo_original>
